<compile_context>
chip_gen: v5e
topology: v5e:2x2
jax: 0.10.0
libtpu: 0.0.40
codegen_flags: <defaults>
</compile_context>

<pallas_src>
import jax
import jax.numpy as jnp
from jax import lax
from jax.experimental import pallas as pl
from jax.experimental.pallas import tpu as pltpu

C_IN = 3
H = W = 224
HW = H * W                    # 50176 = linear in_features
LANES = 128
SUBS = HW // LANES            # 392 sublanes worth of data per channel
OUT_FEATURES = 5


def fused_conv_linear_kernel(cw_ref, x_ref, lw_ref, lb_ref, o_ref):
    # cw_ref : SMEM (3,)              1x1 conv weights (scalars)
    # x_ref  : VMEM (3, 392, 128)     flattened NCHW image, (sublane, lane) dense
    # lw_ref : VMEM (5, 392, 128)     linear weight in native (out, in) layout
    # lb_ref : VMEM (1, 5)            linear bias with conv bias folded in
    # o_ref  : VMEM (1, 5)            output

    # 1x1 conv on the VPU: weighted sum of the 3 channel slabs.
    # (conv bias is folded into lb host-side.)
    conv = (cw_ref[0] * x_ref[0]
            + cw_ref[1] * x_ref[1]
            + cw_ref[2] * x_ref[2])                       # (392, 128) f32

    # Linear as VPU multiply + lane/sublane reduction per output feature.
    # (An MXU matmul with M=1, N=5 would be <0.1% utilized.)
    for n in range(OUT_FEATURES):
        prod = conv * lw_ref[n]                           # (392, 128) f32
        s = jnp.sum(prod, axis=1, keepdims=True)          # (392, 1)  lane reduce
        s = jnp.sum(s, axis=0, keepdims=True)             # (1, 1)    sublane reduce
        o_ref[:, n:n + 1] = (s + lb_ref[:, n:n + 1]).astype(o_ref.dtype)


def prepare_params(conv_w, conv_b, lin_w, lin_b):
    """One-time parameter prep (pure contiguous reshapes + bias folding)."""
    cw = conv_w.reshape(C_IN)                              # (3,)
    lw3d = lin_w.reshape(OUT_FEATURES, SUBS, LANES)        # (5, 392, 128)
    # Fold conv bias into the linear bias:
    #   out[n] = sum_hw lw[n,hw] * (sum_c cw[c] x[c,hw]) + cb*sum_hw lw[n,hw] + lb[n]
    lb = (lin_b + conv_b.reshape(()) * jnp.sum(lin_w, axis=-1))
    lb = lb.reshape(1, OUT_FEATURES)                       # (1, 5)
    return cw, lw3d, lb


def m_forward(x_nchw, cw, lw3d, lb):
    """x_nchw: (1, 3, 224, 224) f32; returns (1, 5) f32."""
    x3d = x_nchw.reshape(C_IN, SUBS, LANES)                # contiguous view

    return pl.pallas_call(
        fused_conv_linear_kernel,
        out_shape=jax.ShapeDtypeStruct((1, OUT_FEATURES), jnp.float32),
        in_specs=[
            pl.BlockSpec(memory_space=pltpu.MemorySpace.SMEM),   # conv w (3,)
            pl.BlockSpec(memory_space=pltpu.MemorySpace.VMEM),   # x (3,392,128)
            pl.BlockSpec(memory_space=pltpu.MemorySpace.VMEM),   # lin w (5,392,128)
            pl.BlockSpec(memory_space=pltpu.MemorySpace.VMEM),   # lb (1,5)
        ],
        out_specs=pl.BlockSpec(memory_space=pltpu.MemorySpace.VMEM),
    )(cw, x3d, lw3d, lb)


if __name__ == "__main__":
    key = jax.random.PRNGKey(0)
    kx, k1, k2, k3, k4 = jax.random.split(key, 5)

    # Parameter shapes fixed by M.__init__ (Linear(224*224, 5) pins HW=50176).
    conv_w = jax.random.normal(k1, (1, C_IN, 1, 1), jnp.float32) * 0.1
    conv_b = jax.random.normal(k2, (1,), jnp.float32) * 0.1
    lin_w = jax.random.normal(k3, (OUT_FEATURES, HW), jnp.float32) * 0.01
    lin_b = jax.random.normal(k4, (OUT_FEATURES,), jnp.float32) * 0.1

    # Input implied by forward: (1, 3, 224, 224) NCHW.
    x = jax.random.normal(kx, (1, C_IN, H, W), jnp.float32)

    cw, lw3d, lb = prepare_params(conv_w, conv_b, lin_w, lin_b)
    out = jax.block_until_ready(m_forward(x, cw, lw3d, lb))

    # Pure-JAX reference check (full-precision f32 dot).
    conv_ref = jnp.einsum('oc,nchw->nohw', conv_w.reshape(1, C_IN),
                          x) + conv_b.reshape(1, 1, 1, 1)
    ref = jnp.dot(conv_ref.reshape(1, -1), lin_w.T,
                  precision=lax.Precision.HIGHEST) + lin_b
    assert out.shape == (1, OUT_FEATURES)
    assert jnp.allclose(out, ref, rtol=1e-3, atol=1e-3), (out, ref)

    print("KERNEL_OK")
</pallas_src>

<mosaic_0001>
module attributes {stable_mosaic.version = 11 : i64} {
  func.func @fused_conv_linear_kernel(%arg0: memref<3xf32, #tpu.memory_space<smem>>, %arg1: memref<3x392x128xf32, #tpu.memory_space<vmem>>, %arg2: memref<5x392x128xf32, #tpu.memory_space<vmem>>, %arg3: memref<1x5xf32, #tpu.memory_space<vmem>>, %arg4: memref<1x5xf32, #tpu.memory_space<vmem>>) attributes {dimension_semantics = [], scalar_prefetch = 0 : i64, scratch_operands = 0 : i64, tpu.core_type = #tpu.core_type<tc>} {
    %c0 = arith.constant 0 : index
    %0 = memref.load %arg0[%c0] : memref<3xf32, #tpu.memory_space<smem>>
    %c0_0 = arith.constant 0 : index
    %c0_1 = arith.constant 0 : index
    %c0_2 = arith.constant 0 : index
    %1 = vector.load %arg1[%c0_0, %c0_1, %c0_2] : memref<3x392x128xf32, #tpu.memory_space<vmem>>, vector<1x392x128xf32>
    %2 = vector.shape_cast %1 : vector<1x392x128xf32> to vector<392x128xf32>
    %3 = vector.broadcast %0 : f32 to vector<392x128xf32>
    %4 = arith.mulf %3, %2 : vector<392x128xf32>
    %c1 = arith.constant 1 : index
    %5 = memref.load %arg0[%c1] : memref<3xf32, #tpu.memory_space<smem>>
    %c1_3 = arith.constant 1 : index
    %c0_4 = arith.constant 0 : index
    %c0_5 = arith.constant 0 : index
    %6 = vector.load %arg1[%c1_3, %c0_4, %c0_5] : memref<3x392x128xf32, #tpu.memory_space<vmem>>, vector<1x392x128xf32>
    %7 = vector.shape_cast %6 : vector<1x392x128xf32> to vector<392x128xf32>
    %8 = vector.broadcast %5 : f32 to vector<392x128xf32>
    %9 = arith.mulf %8, %7 : vector<392x128xf32>
    %10 = arith.addf %4, %9 : vector<392x128xf32>
    %c2 = arith.constant 2 : index
    %11 = memref.load %arg0[%c2] : memref<3xf32, #tpu.memory_space<smem>>
    %c2_6 = arith.constant 2 : index
    %c0_7 = arith.constant 0 : index
    %c0_8 = arith.constant 0 : index
    %12 = vector.load %arg1[%c2_6, %c0_7, %c0_8] : memref<3x392x128xf32, #tpu.memory_space<vmem>>, vector<1x392x128xf32>
    %13 = vector.shape_cast %12 : vector<1x392x128xf32> to vector<392x128xf32>
    %14 = vector.broadcast %11 : f32 to vector<392x128xf32>
    %15 = arith.mulf %14, %13 : vector<392x128xf32>
    %16 = arith.addf %10, %15 : vector<392x128xf32>
    %c0_9 = arith.constant 0 : index
    %c0_10 = arith.constant 0 : index
    %c0_11 = arith.constant 0 : index
    %17 = vector.load %arg2[%c0_9, %c0_10, %c0_11] : memref<5x392x128xf32, #tpu.memory_space<vmem>>, vector<1x392x128xf32>
    %18 = vector.shape_cast %17 : vector<1x392x128xf32> to vector<392x128xf32>
    %19 = arith.mulf %16, %18 : vector<392x128xf32>
    %cst = arith.constant dense<0.000000e+00> : vector<392xf32>
    %20 = vector.multi_reduction <add>, %19, %cst [1] : vector<392x128xf32> to vector<392xf32>
    %21 = vector.shape_cast %20 : vector<392xf32> to vector<392x1xf32>
    %cst_12 = arith.constant dense<0.000000e+00> : vector<1xf32>
    %22 = vector.multi_reduction <add>, %21, %cst_12 [0] : vector<392x1xf32> to vector<1xf32>
    %23 = vector.shape_cast %22 : vector<1xf32> to vector<1x1xf32>
    %c0_13 = arith.constant 0 : index
    %c0_14 = arith.constant 0 : index
    %24 = vector.load %arg3[%c0_13, %c0_14] : memref<1x5xf32, #tpu.memory_space<vmem>>, vector<1x1xf32>
    %25 = arith.addf %23, %24 : vector<1x1xf32>
    %c0_15 = arith.constant 0 : index
    %c0_16 = arith.constant 0 : index
    %26 = vector.load %arg4[%c0_15, %c0_16] : memref<1x5xf32, #tpu.memory_space<vmem>>, vector<1x1xf32>
    tpu.vector_store %arg4[%c0_15, %c0_16], %25 {strides = array<i32>} : memref<1x5xf32, #tpu.memory_space<vmem>>, vector<1x1xf32>,
    %c1_17 = arith.constant 1 : index
    %c0_18 = arith.constant 0 : index
    %c0_19 = arith.constant 0 : index
    %27 = vector.load %arg2[%c1_17, %c0_18, %c0_19] : memref<5x392x128xf32, #tpu.memory_space<vmem>>, vector<1x392x128xf32>
    %28 = vector.shape_cast %27 : vector<1x392x128xf32> to vector<392x128xf32>
    %29 = arith.mulf %16, %28 : vector<392x128xf32>
    %cst_20 = arith.constant dense<0.000000e+00> : vector<392xf32>
    %30 = vector.multi_reduction <add>, %29, %cst_20 [1] : vector<392x128xf32> to vector<392xf32>
    %31 = vector.shape_cast %30 : vector<392xf32> to vector<392x1xf32>
    %cst_21 = arith.constant dense<0.000000e+00> : vector<1xf32>
    %32 = vector.multi_reduction <add>, %31, %cst_21 [0] : vector<392x1xf32> to vector<1xf32>
    %33 = vector.shape_cast %32 : vector<1xf32> to vector<1x1xf32>
    %c0_22 = arith.constant 0 : index
    %c1_23 = arith.constant 1 : index
    %34 = vector.load %arg3[%c0_22, %c1_23] : memref<1x5xf32, #tpu.memory_space<vmem>>, vector<1x1xf32>
    %35 = arith.addf %33, %34 : vector<1x1xf32>
    %c0_24 = arith.constant 0 : index
    %c1_25 = arith.constant 1 : index
    %36 = vector.load %arg4[%c0_24, %c1_25] : memref<1x5xf32, #tpu.memory_space<vmem>>, vector<1x1xf32>
    tpu.vector_store %arg4[%c0_24, %c1_25], %35 {strides = array<i32>} : memref<1x5xf32, #tpu.memory_space<vmem>>, vector<1x1xf32>,
    %c2_26 = arith.constant 2 : index
    %c0_27 = arith.constant 0 : index
    %c0_28 = arith.constant 0 : index
    %37 = vector.load %arg2[%c2_26, %c0_27, %c0_28] : memref<5x392x128xf32, #tpu.memory_space<vmem>>, vector<1x392x128xf32>
    %38 = vector.shape_cast %37 : vector<1x392x128xf32> to vector<392x128xf32>
    %39 = arith.mulf %16, %38 : vector<392x128xf32>
    %cst_29 = arith.constant dense<0.000000e+00> : vector<392xf32>
    %40 = vector.multi_reduction <add>, %39, %cst_29 [1] : vector<392x128xf32> to vector<392xf32>
    %41 = vector.shape_cast %40 : vector<392xf32> to vector<392x1xf32>
    %cst_30 = arith.constant dense<0.000000e+00> : vector<1xf32>
    %42 = vector.multi_reduction <add>, %41, %cst_30 [0] : vector<392x1xf32> to vector<1xf32>
    %43 = vector.shape_cast %42 : vector<1xf32> to vector<1x1xf32>
    %c0_31 = arith.constant 0 : index
    %c2_32 = arith.constant 2 : index
    %44 = vector.load %arg3[%c0_31, %c2_32] : memref<1x5xf32, #tpu.memory_space<vmem>>, vector<1x1xf32>
    %45 = arith.addf %43, %44 : vector<1x1xf32>
    %c0_33 = arith.constant 0 : index
    %c2_34 = arith.constant 2 : index
    %46 = vector.load %arg4[%c0_33, %c2_34] : memref<1x5xf32, #tpu.memory_space<vmem>>, vector<1x1xf32>
    tpu.vector_store %arg4[%c0_33, %c2_34], %45 {strides = array<i32>} : memref<1x5xf32, #tpu.memory_space<vmem>>, vector<1x1xf32>,
    %c3 = arith.constant 3 : index
    %c0_35 = arith.constant 0 : index
    %c0_36 = arith.constant 0 : index
    %47 = vector.load %arg2[%c3, %c0_35, %c0_36] : memref<5x392x128xf32, #tpu.memory_space<vmem>>, vector<1x392x128xf32>
    %48 = vector.shape_cast %47 : vector<1x392x128xf32> to vector<392x128xf32>
    %49 = arith.mulf %16, %48 : vector<392x128xf32>
    %cst_37 = arith.constant dense<0.000000e+00> : vector<392xf32>
    %50 = vector.multi_reduction <add>, %49, %cst_37 [1] : vector<392x128xf32> to vector<392xf32>
    %51 = vector.shape_cast %50 : vector<392xf32> to vector<392x1xf32>
    %cst_38 = arith.constant dense<0.000000e+00> : vector<1xf32>
    %52 = vector.multi_reduction <add>, %51, %cst_38 [0] : vector<392x1xf32> to vector<1xf32>
    %53 = vector.shape_cast %52 : vector<1xf32> to vector<1x1xf32>
    %c0_39 = arith.constant 0 : index
    %c3_40 = arith.constant 3 : index
    %54 = vector.load %arg3[%c0_39, %c3_40] : memref<1x5xf32, #tpu.memory_space<vmem>>, vector<1x1xf32>
    %55 = arith.addf %53, %54 : vector<1x1xf32>
    %c0_41 = arith.constant 0 : index
    %c3_42 = arith.constant 3 : index
    %56 = vector.load %arg4[%c0_41, %c3_42] : memref<1x5xf32, #tpu.memory_space<vmem>>, vector<1x1xf32>
    tpu.vector_store %arg4[%c0_41, %c3_42], %55 {strides = array<i32>} : memref<1x5xf32, #tpu.memory_space<vmem>>, vector<1x1xf32>,
    %c4 = arith.constant 4 : index
    %c0_43 = arith.constant 0 : index
    %c0_44 = arith.constant 0 : index
    %57 = vector.load %arg2[%c4, %c0_43, %c0_44] : memref<5x392x128xf32, #tpu.memory_space<vmem>>, vector<1x392x128xf32>
    %58 = vector.shape_cast %57 : vector<1x392x128xf32> to vector<392x128xf32>
    %59 = arith.mulf %16, %58 : vector<392x128xf32>
    %cst_45 = arith.constant dense<0.000000e+00> : vector<392xf32>
    %60 = vector.multi_reduction <add>, %59, %cst_45 [1] : vector<392x128xf32> to vector<392xf32>
    %61 = vector.shape_cast %60 : vector<392xf32> to vector<392x1xf32>
    %cst_46 = arith.constant dense<0.000000e+00> : vector<1xf32>
    %62 = vector.multi_reduction <add>, %61, %cst_46 [0] : vector<392x1xf32> to vector<1xf32>
    %63 = vector.shape_cast %62 : vector<1xf32> to vector<1x1xf32>
    %c0_47 = arith.constant 0 : index
    %c4_48 = arith.constant 4 : index
    %64 = vector.load %arg3[%c0_47, %c4_48] : memref<1x5xf32, #tpu.memory_space<vmem>>, vector<1x1xf32>
    %65 = arith.addf %63, %64 : vector<1x1xf32>
    %c0_49 = arith.constant 0 : index
    %c4_50 = arith.constant 4 : index
    %66 = vector.load %arg4[%c0_49, %c4_50] : memref<1x5xf32, #tpu.memory_space<vmem>>, vector<1x1xf32>
    tpu.vector_store %arg4[%c0_49, %c4_50], %65 {strides = array<i32>} : memref<1x5xf32, #tpu.memory_space<vmem>>, vector<1x1xf32>,
    return
  }
}

</mosaic_0001>

<llo_original>
// kernel: tpu_custom_call.1
$region0: #{tpu_custom_call.1}
  #allocation0 [shape = 'u32[]', space=smem, size = 0x4, offset = 0x4, fixed_abs, tag = 'smem constant byte address 0x4 - core index']
  #allocation1 [shape = 'u32[72,128]{1,0:T(1,128)}', space=vmem, size = 0x9000, scoped, tag = 'internal scratch']
  %s0 = inlined_call_operand.hbm [shape: f32[3], index: 0, kind: input, shape index: {}]
  %s1 = inlined_call_operand.hbm [shape: f32[3,392,128], index: 1, kind: input, shape index: {}]
  %s2 = inlined_call_operand.hbm [shape: f32[5,392,128], index: 2, kind: input, shape index: {}]
  %s3 = inlined_call_operand.vmem [shape: f32[1,5], index: 3, kind: input, shape index: {}]
  %s4 = inlined_call_operand.hbm [shape: f32[1,5], index: 4, kind: output, shape index: {}]
  %s5 = sld [smem:[#allocation0]]
  $region38: #{tpu_custom_call.1} parent=0
    _
  %s7 = ssub.s32 1, %s5
  %s8 = scalar_select 0, %s7, %s5
  $region1: #{tpu_custom_call.1} parent=0
    #allocation2 [shape = 'u8[512]{0}', space=smem, size = 0x200, scoped, tag = 'input window, operand 0, single buffered']
    #allocation3 [shape = 's32[1]{0}', space=sflag, size = 0x4, scoped, tag = 'scoped memory for tpu_custom_call.1']
    #allocation4 [shape = 's32[1]{0}', space=sflag, size = 0x4, scoped, tag = 'scoped memory for tpu_custom_call.1']
    #allocation5 [shape = 's32[1]{0}', space=sflag, size = 0x4, scoped, tag = 'scoped memory for tpu_custom_call.1']
    #allocation6 [shape = 'u8[602112]{0}', space=vmem, size = 0x93000, scoped, tag = 'input window, operand 1, single buffered']
    #allocation7 [shape = 'u8[1003520]{0}', space=vmem, size = 0xf5000, scoped, tag = 'input window, operand 2, single buffered']
    #allocation8 [shape = 's32[1]{0}', space=sflag, size = 0x4, scoped, tag = 'scoped memory for tpu_custom_call.1']
    #allocation9 [shape = 'u8[512]{0}', space=vmem, size = 0x400, scoped, tag = 'output window, operand 0, single buffered']
    %9 = vsyncpa [#allocation5], 0
    %10 = vsyncpa [#allocation3], 0
    %11 = vsyncpa [#allocation8], 0
    %12 = vsyncpa [#allocation4], 0
    // Predicated region
    $region2: #{tpu_custom_call.1} parent=1 // pred_check
      _
    $region3: #{tpu_custom_call.1} parent=1 // pred_check_branch
      %14 = sbr.rel (0) target = $region5
    $region4: #{tpu_custom_call.1} parent=1 // pred_region
      %16 = vsyncadd [#allocation5], 0
      %s18 = sshll.u32 %s0, 4
      %s19 = int_to_ptr.hbm [resolvable:$true] %s18
      %21 = dma.hbm_to_smem %s19, 16, [#allocation2], [#allocation5]
    $region5: #{tpu_custom_call.1} parent=1 // pred_fallthru
      _
    // Predicated region
    $region6: #{tpu_custom_call.1} parent=1 // pred_check
      _
    $region7: #{tpu_custom_call.1} parent=1 // pred_check_branch
      %23 = sbr.rel (0) target = $region9
    $region8: #{tpu_custom_call.1} parent=1 // pred_region
      %25 = vsyncadd [#allocation3], 0
      %s26 = sshll.u32 %s1, 4
      %s27 = int_to_ptr.hbm [resolvable:$true] %s26
      %s28 = sshll.u32 [#allocation6], 4
      %s29 = int_to_ptr.vmem [resolvable:$true] %s28
      %34 = dma.hbm_to_vmem [thread:$0]  %s27, 18816, %s29, [#allocation3], 128, 128, 8
    $region9: #{tpu_custom_call.1} parent=1 // pred_fallthru
      _
    // Predicated region
    $region10: #{tpu_custom_call.1} parent=1 // pred_check
      _
    $region11: #{tpu_custom_call.1} parent=1 // pred_check_branch
      %36 = sbr.rel (0) target = $region13
    $region12: #{tpu_custom_call.1} parent=1 // pred_region
      %38 = vsyncadd [#allocation8], 0
      %s39 = sshll.u32 %s2, 4
      %s40 = int_to_ptr.hbm [resolvable:$true] %s39
      %s41 = sshll.u32 [#allocation7], 4
      %s42 = int_to_ptr.vmem [resolvable:$true] %s41
      %47 = dma.hbm_to_vmem [thread:$0]  %s40, 31360, %s42, [#allocation8], 128, 128, 8
    $region13: #{tpu_custom_call.1} parent=1 // pred_fallthru
      _
    // Predicated region
    $region14: #{tpu_custom_call.1} parent=1 // pred_check
      _
    $region15: #{tpu_custom_call.1} parent=1 // pred_check_branch
      %49 = sbr.rel (0) target = $region17
    $region16: #{tpu_custom_call.1} parent=1 // pred_region
      _
    $region17: #{tpu_custom_call.1} parent=1 // pred_fallthru
      _
    // Predicated region
    $region18: #{tpu_custom_call.1} parent=1 // pred_check
      _
    $region19: #{tpu_custom_call.1} parent=1 // pred_check_branch
      %51 = sbr.rel (0) target = $region21
    $region20: #{tpu_custom_call.1} parent=1 // pred_region
      %53 = dma.done [#allocation5], 16
    $region21: #{tpu_custom_call.1} parent=1 // pred_fallthru
      _
    // Predicated region
    $region22: #{tpu_custom_call.1} parent=1 // pred_check
      _
    $region23: #{tpu_custom_call.1} parent=1 // pred_check_branch
      %55 = sbr.rel (0) target = $region25
    $region24: #{tpu_custom_call.1} parent=1 // pred_region
      %57 = dma.done [#allocation3], 18816
    $region25: #{tpu_custom_call.1} parent=1 // pred_fallthru
      _
    // Predicated region
    $region26: #{tpu_custom_call.1} parent=1 // pred_check
      _
    $region27: #{tpu_custom_call.1} parent=1 // pred_check_branch
      %59 = sbr.rel (0) target = $region29
    $region28: #{tpu_custom_call.1} parent=1 // pred_region
      %61 = dma.done [#allocation8], 31360
    $region29: #{tpu_custom_call.1} parent=1 // pred_fallthru
      _
    %62 = sfence
    %s63 = sld [smem:[#allocation2]]
    %v64 = vld [vmem:[#allocation6] sm:$0xff]
    %v65 = vld [vmem:[#allocation6 + $0x8] sm:$0xff]
    %v66 = vld [vmem:[#allocation6 + $0x10] sm:$0xff]
    %v67 = vld [vmem:[#allocation6 + $0x18] sm:$0xff]
    %v68 = vld [vmem:[#allocation6 + $0x20] sm:$0xff]
    %v69 = vld [vmem:[#allocation6 + $0x28] sm:$0xff]
    %v70 = vld [vmem:[#allocation6 + $0x30] sm:$0xff]
    %v71 = vld [vmem:[#allocation6 + $0x38] sm:$0xff]
    %v72 = vld [vmem:[#allocation6 + $0x40] sm:$0xff]
    %v73 = vld [vmem:[#allocation6 + $0x48] sm:$0xff]
    %v74 = vld [vmem:[#allocation6 + $0x50] sm:$0xff]
    %v75 = vld [vmem:[#allocation6 + $0x58] sm:$0xff]
    %v76 = vld [vmem:[#allocation6 + $0x60] sm:$0xff]
    %v77 = vld [vmem:[#allocation6 + $0x68] sm:$0xff]
    %v78 = vld [vmem:[#allocation6 + $0x70] sm:$0xff]
    %v79 = vld [vmem:[#allocation6 + $0x78] sm:$0xff]
    %v80 = vld [vmem:[#allocation6 + $0x80] sm:$0xff]
    %v81 = vld [vmem:[#allocation6 + $0x88] sm:$0xff]
    %v82 = vld [vmem:[#allocation6 + $0x90] sm:$0xff]
    %v83 = vld [vmem:[#allocation6 + $0x98] sm:$0xff]
    %v84 = vld [vmem:[#allocation6 + $0xa0] sm:$0xff]
    %v85 = vld [vmem:[#allocation6 + $0xa8] sm:$0xff]
    %v86 = vld [vmem:[#allocation6 + $0xb0] sm:$0xff]
    %v87 = vld [vmem:[#allocation6 + $0xb8] sm:$0xff]
    %v88 = vld [vmem:[#allocation6 + $0xc0] sm:$0xff]
    %v89 = vld [vmem:[#allocation6 + $0xc8] sm:$0xff]
    %v90 = vld [vmem:[#allocation6 + $0xd0] sm:$0xff]
    %v91 = vld [vmem:[#allocation6 + $0xd8] sm:$0xff]
    %v92 = vld [vmem:[#allocation6 + $0xe0] sm:$0xff]
    %v93 = vld [vmem:[#allocation6 + $0xe8] sm:$0xff]
    %v94 = vld [vmem:[#allocation6 + $0xf0] sm:$0xff]
    %v95 = vld [vmem:[#allocation6 + $0xf8] sm:$0xff]
    %v96 = vld [vmem:[#allocation6 + $0x100] sm:$0xff]
    %v97 = vld [vmem:[#allocation6 + $0x108] sm:$0xff]
    %v98 = vld [vmem:[#allocation6 + $0x110] sm:$0xff]
    %v99 = vld [vmem:[#allocation6 + $0x118] sm:$0xff]
    %v100 = vld [vmem:[#allocation6 + $0x120] sm:$0xff]
    %v101 = vld [vmem:[#allocation6 + $0x128] sm:$0xff]
    %v102 = vld [vmem:[#allocation6 + $0x130] sm:$0xff]
    %v103 = vld [vmem:[#allocation6 + $0x138] sm:$0xff]
    %v104 = vld [vmem:[#allocation6 + $0x140] sm:$0xff]
    %v105 = vld [vmem:[#allocation6 + $0x148] sm:$0xff]
    %v106 = vld [vmem:[#allocation6 + $0x150] sm:$0xff]
    %v107 = vld [vmem:[#allocation6 + $0x158] sm:$0xff]
    %v108 = vld [vmem:[#allocation6 + $0x160] sm:$0xff]
    %v109 = vld [vmem:[#allocation6 + $0x168] sm:$0xff]
    %v110 = vld [vmem:[#allocation6 + $0x170] sm:$0xff]
    %v111 = vld [vmem:[#allocation6 + $0x178] sm:$0xff]
    %v112 = vld [vmem:[#allocation6 + $0x180] sm:$0xff]
    %v113 = vstv %s63
    %v114 = vmul.f32 %v113, %v64
    %v115 = vmul.f32 %v113, %v65
    %v116 = vmul.f32 %v113, %v66
    %v117 = vmul.f32 %v113, %v67
    %v118 = vmul.f32 %v113, %v68
    %v119 = vmul.f32 %v113, %v69
    %v120 = vmul.f32 %v113, %v70
    %v121 = vmul.f32 %v113, %v71
    %v122 = vmul.f32 %v113, %v72
    %v123 = vmul.f32 %v113, %v73
    %v124 = vmul.f32 %v113, %v74
    %v125 = vmul.f32 %v113, %v75
    %v126 = vmul.f32 %v113, %v76
    %v127 = vmul.f32 %v113, %v77
    %v128 = vmul.f32 %v113, %v78
    %v129 = vmul.f32 %v113, %v79
    %v130 = vmul.f32 %v113, %v80
    %v131 = vmul.f32 %v113, %v81
    %v132 = vmul.f32 %v113, %v82
    %v133 = vmul.f32 %v113, %v83
    %v134 = vmul.f32 %v113, %v84
    %v135 = vmul.f32 %v113, %v85
    %v136 = vmul.f32 %v113, %v86
    %v137 = vmul.f32 %v113, %v87
    %v138 = vmul.f32 %v113, %v88
    %v139 = vmul.f32 %v113, %v89
    %v140 = vmul.f32 %v113, %v90
    %v141 = vmul.f32 %v113, %v91
    %v142 = vmul.f32 %v113, %v92
    %v143 = vmul.f32 %v113, %v93
    %v144 = vmul.f32 %v113, %v94
    %v145 = vmul.f32 %v113, %v95
    %v146 = vmul.f32 %v113, %v96
    %v147 = vmul.f32 %v113, %v97
    %v148 = vmul.f32 %v113, %v98
    %v149 = vmul.f32 %v113, %v99
    %v150 = vmul.f32 %v113, %v100
    %v151 = vmul.f32 %v113, %v101
    %v152 = vmul.f32 %v113, %v102
    %v153 = vmul.f32 %v113, %v103
    %v154 = vmul.f32 %v113, %v104
    %v155 = vmul.f32 %v113, %v105
    %v156 = vmul.f32 %v113, %v106
    %v157 = vmul.f32 %v113, %v107
    %v158 = vmul.f32 %v113, %v108
    %v159 = vmul.f32 %v113, %v109
    %v160 = vmul.f32 %v113, %v110
    %v161 = vmul.f32 %v113, %v111
    %v162 = vmul.f32 %v113, %v112
    %s163 = sld [smem:[#allocation2 + $0x1]]
    %s164 = scalar_lea.vmem [#allocation6], 392
    %v165 = vld [vmem:[%s164] sm:$0xff]
    %v166 = vld [vmem:[%s164 + $0x8] sm:$0xff]
    %v167 = vld [vmem:[%s164 + $0x10] sm:$0xff]
    %v168 = vld [vmem:[%s164 + $0x18] sm:$0xff]
    %v169 = vld [vmem:[%s164 + $0x20] sm:$0xff]
    %v170 = vld [vmem:[%s164 + $0x28] sm:$0xff]
    %v171 = vld [vmem:[%s164 + $0x30] sm:$0xff]
    %v172 = vld [vmem:[%s164 + $0x38] sm:$0xff]
    %v173 = vld [vmem:[%s164 + $0x40] sm:$0xff]
    %v174 = vld [vmem:[%s164 + $0x48] sm:$0xff]
    %v175 = vld [vmem:[%s164 + $0x50] sm:$0xff]
    %v176 = vld [vmem:[%s164 + $0x58] sm:$0xff]
    %v177 = vld [vmem:[%s164 + $0x60] sm:$0xff]
    %v178 = vld [vmem:[%s164 + $0x68] sm:$0xff]
    %v179 = vld [vmem:[%s164 + $0x70] sm:$0xff]
    %v180 = vld [vmem:[%s164 + $0x78] sm:$0xff]
    %v181 = vld [vmem:[%s164 + $0x80] sm:$0xff]
    %v182 = vld [vmem:[%s164 + $0x88] sm:$0xff]
    %v183 = vld [vmem:[%s164 + $0x90] sm:$0xff]
    %v184 = vld [vmem:[%s164 + $0x98] sm:$0xff]
    %v185 = vld [vmem:[%s164 + $0xa0] sm:$0xff]
    %v186 = vld [vmem:[%s164 + $0xa8] sm:$0xff]
    %v187 = vld [vmem:[%s164 + $0xb0] sm:$0xff]
    %v188 = vld [vmem:[%s164 + $0xb8] sm:$0xff]
    %v189 = vld [vmem:[%s164 + $0xc0] sm:$0xff]
    %v190 = vld [vmem:[%s164 + $0xc8] sm:$0xff]
    %v191 = vld [vmem:[%s164 + $0xd0] sm:$0xff]
    %v192 = vld [vmem:[%s164 + $0xd8] sm:$0xff]
    %v193 = vld [vmem:[%s164 + $0xe0] sm:$0xff]
    %v194 = vld [vmem:[%s164 + $0xe8] sm:$0xff]
    %v195 = vld [vmem:[%s164 + $0xf0] sm:$0xff]
    %v196 = vld [vmem:[%s164 + $0xf8] sm:$0xff]
    %v197 = vld [vmem:[%s164 + $0x100] sm:$0xff]
    %v198 = vld [vmem:[%s164 + $0x108] sm:$0xff]
    %v199 = vld [vmem:[%s164 + $0x110] sm:$0xff]
    %v200 = vld [vmem:[%s164 + $0x118] sm:$0xff]
    %v201 = vld [vmem:[%s164 + $0x120] sm:$0xff]
    %v202 = vld [vmem:[%s164 + $0x128] sm:$0xff]
    %v203 = vld [vmem:[%s164 + $0x130] sm:$0xff]
    %v204 = vld [vmem:[%s164 + $0x138] sm:$0xff]
    %v205 = vld [vmem:[%s164 + $0x140] sm:$0xff]
    %v206 = vld [vmem:[%s164 + $0x148] sm:$0xff]
    %v207 = vld [vmem:[%s164 + $0x150] sm:$0xff]
    %v208 = vld [vmem:[%s164 + $0x158] sm:$0xff]
    %v209 = vld [vmem:[%s164 + $0x160] sm:$0xff]
    %v210 = vld [vmem:[%s164 + $0x168] sm:$0xff]
    %v211 = vld [vmem:[%s164 + $0x170] sm:$0xff]
    %v212 = vld [vmem:[%s164 + $0x178] sm:$0xff]
    %v213 = vld [vmem:[%s164 + $0x180] sm:$0xff]
    %v214 = vstv %s163
    %v215 = vmul.f32 %v214, %v165
    %v216 = vmul.f32 %v214, %v166
    %v217 = vmul.f32 %v214, %v167
    %v218 = vmul.f32 %v214, %v168
    %v219 = vmul.f32 %v214, %v169
    %v220 = vmul.f32 %v214, %v170
    %v221 = vmul.f32 %v214, %v171
    %v222 = vmul.f32 %v214, %v172
    %v223 = vmul.f32 %v214, %v173
    %v224 = vmul.f32 %v214, %v174
    %v225 = vmul.f32 %v214, %v175
    %v226 = vmul.f32 %v214, %v176
    %v227 = vmul.f32 %v214, %v177
    %v228 = vmul.f32 %v214, %v178
    %v229 = vmul.f32 %v214, %v179
    %v230 = vmul.f32 %v214, %v180
    %v231 = vmul.f32 %v214, %v181
    %v232 = vmul.f32 %v214, %v182
    %v233 = vmul.f32 %v214, %v183
    %v234 = vmul.f32 %v214, %v184
    %v235 = vmul.f32 %v214, %v185
    %v236 = vmul.f32 %v214, %v186
    %v237 = vmul.f32 %v214, %v187
    %v238 = vmul.f32 %v214, %v188
    %v239 = vmul.f32 %v214, %v189
    %v240 = vmul.f32 %v214, %v190
    %v241 = vmul.f32 %v214, %v191
    %v242 = vmul.f32 %v214, %v192
    %v243 = vmul.f32 %v214, %v193
    %v244 = vmul.f32 %v214, %v194
    %v245 = vmul.f32 %v214, %v195
    %v246 = vmul.f32 %v214, %v196
    %v247 = vmul.f32 %v214, %v197
    %v248 = vmul.f32 %v214, %v198
    %v249 = vmul.f32 %v214, %v199
    %v250 = vmul.f32 %v214, %v200
    %v251 = vmul.f32 %v214, %v201
    %v252 = vmul.f32 %v214, %v202
    %v253 = vmul.f32 %v214, %v203
    %v254 = vmul.f32 %v214, %v204
    %v255 = vmul.f32 %v214, %v205
    %v256 = vmul.f32 %v214, %v206
    %v257 = vmul.f32 %v214, %v207
    %v258 = vmul.f32 %v214, %v208
    %v259 = vmul.f32 %v214, %v209
    %v260 = vmul.f32 %v214, %v210
    %v261 = vmul.f32 %v214, %v211
    %v262 = vmul.f32 %v214, %v212
    %v263 = vmul.f32 %v214, %v213
    %v264 = vadd.f32 %v114, %v215
    %v265 = vadd.f32 %v115, %v216
    %v266 = vadd.f32 %v116, %v217
    %v267 = vadd.f32 %v117, %v218
    %v268 = vadd.f32 %v118, %v219
    %v269 = vadd.f32 %v119, %v220
    %v270 = vadd.f32 %v120, %v221
    %v271 = vadd.f32 %v121, %v222
    %v272 = vadd.f32 %v122, %v223
    %v273 = vadd.f32 %v123, %v224
    %v274 = vadd.f32 %v124, %v225
    %v275 = vadd.f32 %v125, %v226
    %v276 = vadd.f32 %v126, %v227
    %v277 = vadd.f32 %v127, %v228
    %v278 = vadd.f32 %v128, %v229
    %v279 = vadd.f32 %v129, %v230
    %v280 = vadd.f32 %v130, %v231
    %v281 = vadd.f32 %v131, %v232
    %v282 = vadd.f32 %v132, %v233
    %v283 = vadd.f32 %v133, %v234
    %v284 = vadd.f32 %v134, %v235
    %v285 = vadd.f32 %v135, %v236
    %v286 = vadd.f32 %v136, %v237
    %v287 = vadd.f32 %v137, %v238
    %v288 = vadd.f32 %v138, %v239
    %v289 = vadd.f32 %v139, %v240
    %v290 = vadd.f32 %v140, %v241
    %v291 = vadd.f32 %v141, %v242
    %v292 = vadd.f32 %v142, %v243
    %v293 = vadd.f32 %v143, %v244
    %v294 = vadd.f32 %v144, %v245
    %v295 = vadd.f32 %v145, %v246
    %v296 = vadd.f32 %v146, %v247
    %v297 = vadd.f32 %v147, %v248
    %v298 = vadd.f32 %v148, %v249
    %v299 = vadd.f32 %v149, %v250
    %v300 = vadd.f32 %v150, %v251
    %v301 = vadd.f32 %v151, %v252
    %v302 = vadd.f32 %v152, %v253
    %v303 = vadd.f32 %v153, %v254
    %v304 = vadd.f32 %v154, %v255
    %v305 = vadd.f32 %v155, %v256
    %v306 = vadd.f32 %v156, %v257
    %v307 = vadd.f32 %v157, %v258
    %v308 = vadd.f32 %v158, %v259
    %v309 = vadd.f32 %v159, %v260
    %v310 = vadd.f32 %v160, %v261
    %v311 = vadd.f32 %v161, %v262
    %v312 = vadd.f32 %v162, %v263
    %s313 = sld [smem:[#allocation2 + $0x2]]
    %s314 = scalar_lea.vmem [#allocation6], 784
    %v315 = vld [vmem:[%s314] sm:$0xff]
    %v316 = vld [vmem:[%s314 + $0x8] sm:$0xff]
    %v317 = vld [vmem:[%s314 + $0x10] sm:$0xff]
    %v318 = vld [vmem:[%s314 + $0x18] sm:$0xff]
    %v319 = vld [vmem:[%s314 + $0x20] sm:$0xff]
    %v320 = vld [vmem:[%s314 + $0x28] sm:$0xff]
    %v321 = vld [vmem:[%s314 + $0x30] sm:$0xff]
    %v322 = vld [vmem:[%s314 + $0x38] sm:$0xff]
    %v323 = vld [vmem:[%s314 + $0x40] sm:$0xff]
    %v324 = vld [vmem:[%s314 + $0x48] sm:$0xff]
    %v325 = vld [vmem:[%s314 + $0x50] sm:$0xff]
    %v326 = vld [vmem:[%s314 + $0x58] sm:$0xff]
    %v327 = vld [vmem:[%s314 + $0x60] sm:$0xff]
    %v328 = vld [vmem:[%s314 + $0x68] sm:$0xff]
    %v329 = vld [vmem:[%s314 + $0x70] sm:$0xff]
    %v330 = vld [vmem:[%s314 + $0x78] sm:$0xff]
    %v331 = vld [vmem:[%s314 + $0x80] sm:$0xff]
    %v332 = vld [vmem:[%s314 + $0x88] sm:$0xff]
    %v333 = vld [vmem:[%s314 + $0x90] sm:$0xff]
    %v334 = vld [vmem:[%s314 + $0x98] sm:$0xff]
    %v335 = vld [vmem:[%s314 + $0xa0] sm:$0xff]
    %v336 = vld [vmem:[%s314 + $0xa8] sm:$0xff]
    %v337 = vld [vmem:[%s314 + $0xb0] sm:$0xff]
    %v338 = vld [vmem:[%s314 + $0xb8] sm:$0xff]
    %v339 = vld [vmem:[%s314 + $0xc0] sm:$0xff]
    %v340 = vld [vmem:[%s314 + $0xc8] sm:$0xff]
    %v341 = vld [vmem:[%s314 + $0xd0] sm:$0xff]
    %v342 = vld [vmem:[%s314 + $0xd8] sm:$0xff]
    %v343 = vld [vmem:[%s314 + $0xe0] sm:$0xff]
    %v344 = vld [vmem:[%s314 + $0xe8] sm:$0xff]
    %v345 = vld [vmem:[%s314 + $0xf0] sm:$0xff]
    %v346 = vld [vmem:[%s314 + $0xf8] sm:$0xff]
    %v347 = vld [vmem:[%s314 + $0x100] sm:$0xff]
    %v348 = vld [vmem:[%s314 + $0x108] sm:$0xff]
    %v349 = vld [vmem:[%s314 + $0x110] sm:$0xff]
    %v350 = vld [vmem:[%s314 + $0x118] sm:$0xff]
    %v351 = vld [vmem:[%s314 + $0x120] sm:$0xff]
    %v352 = vld [vmem:[%s314 + $0x128] sm:$0xff]
    %v353 = vld [vmem:[%s314 + $0x130] sm:$0xff]
    %v354 = vld [vmem:[%s314 + $0x138] sm:$0xff]
    %v355 = vld [vmem:[%s314 + $0x140] sm:$0xff]
    %v356 = vld [vmem:[%s314 + $0x148] sm:$0xff]
    %v357 = vld [vmem:[%s314 + $0x150] sm:$0xff]
    %v358 = vld [vmem:[%s314 + $0x158] sm:$0xff]
    %v359 = vld [vmem:[%s314 + $0x160] sm:$0xff]
    %v360 = vld [vmem:[%s314 + $0x168] sm:$0xff]
    %v361 = vld [vmem:[%s314 + $0x170] sm:$0xff]
    %v362 = vld [vmem:[%s314 + $0x178] sm:$0xff]
    %v363 = vld [vmem:[%s314 + $0x180] sm:$0xff]
    %v364 = vstv %s313
    %v365 = vmul.f32 %v364, %v315
    %v366 = vmul.f32 %v364, %v316
    %v367 = vmul.f32 %v364, %v317
    %v368 = vmul.f32 %v364, %v318
    %v369 = vmul.f32 %v364, %v319
    %v370 = vmul.f32 %v364, %v320
    %v371 = vmul.f32 %v364, %v321
    %v372 = vmul.f32 %v364, %v322
    %v373 = vmul.f32 %v364, %v323
    %v374 = vmul.f32 %v364, %v324
    %v375 = vmul.f32 %v364, %v325
    %v376 = vmul.f32 %v364, %v326
    %v377 = vmul.f32 %v364, %v327
    %v378 = vmul.f32 %v364, %v328
    %v379 = vmul.f32 %v364, %v329
    %v380 = vmul.f32 %v364, %v330
    %v381 = vmul.f32 %v364, %v331
    %v382 = vmul.f32 %v364, %v332
    %v383 = vmul.f32 %v364, %v333
    %v384 = vmul.f32 %v364, %v334
    %v385 = vmul.f32 %v364, %v335
    %v386 = vmul.f32 %v364, %v336
    %v387 = vmul.f32 %v364, %v337
    %v388 = vmul.f32 %v364, %v338
    %v389 = vmul.f32 %v364, %v339
    %v390 = vmul.f32 %v364, %v340
    %v391 = vmul.f32 %v364, %v341
    %v392 = vmul.f32 %v364, %v342
    %v393 = vmul.f32 %v364, %v343
    %v394 = vmul.f32 %v364, %v344
    %v395 = vmul.f32 %v364, %v345
    %v396 = vmul.f32 %v364, %v346
    %v397 = vmul.f32 %v364, %v347
    %v398 = vmul.f32 %v364, %v348
    %v399 = vmul.f32 %v364, %v349
    %v400 = vmul.f32 %v364, %v350
    %v401 = vmul.f32 %v364, %v351
    %v402 = vmul.f32 %v364, %v352
    %v403 = vmul.f32 %v364, %v353
    %v404 = vmul.f32 %v364, %v354
    %v405 = vmul.f32 %v364, %v355
    %v406 = vmul.f32 %v364, %v356
    %v407 = vmul.f32 %v364, %v357
    %v408 = vmul.f32 %v364, %v358
    %v409 = vmul.f32 %v364, %v359
    %v410 = vmul.f32 %v364, %v360
    %v411 = vmul.f32 %v364, %v361
    %v412 = vmul.f32 %v364, %v362
    %v413 = vmul.f32 %v364, %v363
    %v414 = vadd.f32 %v264, %v365
    %v415 = vadd.f32 %v265, %v366
    %v416 = vadd.f32 %v266, %v367
    %v417 = vadd.f32 %v267, %v368
    %v418 = vadd.f32 %v268, %v369
    %v419 = vadd.f32 %v269, %v370
    %v420 = vadd.f32 %v270, %v371
    %v421 = vadd.f32 %v271, %v372
    %v422 = vadd.f32 %v272, %v373
    %v423 = vadd.f32 %v273, %v374
    %v424 = vadd.f32 %v274, %v375
    %v425 = vadd.f32 %v275, %v376
    %v426 = vadd.f32 %v276, %v377
    %v427 = vadd.f32 %v277, %v378
    %v428 = vadd.f32 %v278, %v379
    %v429 = vadd.f32 %v279, %v380
    %v430 = vadd.f32 %v280, %v381
    %v431 = vadd.f32 %v281, %v382
    %v432 = vadd.f32 %v282, %v383
    %v433 = vadd.f32 %v283, %v384
    %v434 = vadd.f32 %v284, %v385
    %v435 = vadd.f32 %v285, %v386
    %v436 = vadd.f32 %v286, %v387
    %v437 = vadd.f32 %v287, %v388
    %v438 = vadd.f32 %v288, %v389
    %v439 = vadd.f32 %v289, %v390
    %v440 = vadd.f32 %v290, %v391
    %v441 = vadd.f32 %v291, %v392
    %v442 = vadd.f32 %v292, %v393
    %v443 = vadd.f32 %v293, %v394
    %v444 = vadd.f32 %v294, %v395
    %v445 = vadd.f32 %v295, %v396
    %v446 = vadd.f32 %v296, %v397
    %v447 = vadd.f32 %v297, %v398
    %v448 = vadd.f32 %v298, %v399
    %v449 = vadd.f32 %v299, %v400
    %v450 = vadd.f32 %v300, %v401
    %v451 = vadd.f32 %v301, %v402
    %v452 = vadd.f32 %v302, %v403
    %v453 = vadd.f32 %v303, %v404
    %v454 = vadd.f32 %v304, %v405
    %v455 = vadd.f32 %v305, %v406
    %v456 = vadd.f32 %v306, %v407
    %v457 = vadd.f32 %v307, %v408
    %v458 = vadd.f32 %v308, %v409
    %v459 = vadd.f32 %v309, %v410
    %v460 = vadd.f32 %v310, %v411
    %v461 = vadd.f32 %v311, %v412
    %v462 = vadd.f32 %v312, %v413
    %v463 = vld [vmem:[#allocation7] sm:$0xff]
    %v464 = vld [vmem:[#allocation7 + $0x8] sm:$0xff]
    %v465 = vld [vmem:[#allocation7 + $0x10] sm:$0xff]
    %v466 = vld [vmem:[#allocation7 + $0x18] sm:$0xff]
    %v467 = vld [vmem:[#allocation7 + $0x20] sm:$0xff]
    %v468 = vld [vmem:[#allocation7 + $0x28] sm:$0xff]
    %v469 = vld [vmem:[#allocation7 + $0x30] sm:$0xff]
    %v470 = vld [vmem:[#allocation7 + $0x38] sm:$0xff]
    %v471 = vld [vmem:[#allocation7 + $0x40] sm:$0xff]
    %v472 = vld [vmem:[#allocation7 + $0x48] sm:$0xff]
    %v473 = vld [vmem:[#allocation7 + $0x50] sm:$0xff]
    %v474 = vld [vmem:[#allocation7 + $0x58] sm:$0xff]
    %v475 = vld [vmem:[#allocation7 + $0x60] sm:$0xff]
    %v476 = vld [vmem:[#allocation7 + $0x68] sm:$0xff]
    %v477 = vld [vmem:[#allocation7 + $0x70] sm:$0xff]
    %v478 = vld [vmem:[#allocation7 + $0x78] sm:$0xff]
    %v479 = vld [vmem:[#allocation7 + $0x80] sm:$0xff]
    %v480 = vld [vmem:[#allocation7 + $0x88] sm:$0xff]
    %v481 = vld [vmem:[#allocation7 + $0x90] sm:$0xff]
    %v482 = vld [vmem:[#allocation7 + $0x98] sm:$0xff]
    %v483 = vld [vmem:[#allocation7 + $0xa0] sm:$0xff]
    %v484 = vld [vmem:[#allocation7 + $0xa8] sm:$0xff]
    %v485 = vld [vmem:[#allocation7 + $0xb0] sm:$0xff]
    %v486 = vld [vmem:[#allocation7 + $0xb8] sm:$0xff]
    %v487 = vld [vmem:[#allocation7 + $0xc0] sm:$0xff]
    %v488 = vld [vmem:[#allocation7 + $0xc8] sm:$0xff]
    %v489 = vld [vmem:[#allocation7 + $0xd0] sm:$0xff]
    %v490 = vld [vmem:[#allocation7 + $0xd8] sm:$0xff]
    %v491 = vld [vmem:[#allocation7 + $0xe0] sm:$0xff]
    %v492 = vld [vmem:[#allocation7 + $0xe8] sm:$0xff]
    %v493 = vld [vmem:[#allocation7 + $0xf0] sm:$0xff]
    %v494 = vld [vmem:[#allocation7 + $0xf8] sm:$0xff]
    %v495 = vld [vmem:[#allocation7 + $0x100] sm:$0xff]
    %v496 = vld [vmem:[#allocation7 + $0x108] sm:$0xff]
    %v497 = vld [vmem:[#allocation7 + $0x110] sm:$0xff]
    %v498 = vld [vmem:[#allocation7 + $0x118] sm:$0xff]
    %v499 = vld [vmem:[#allocation7 + $0x120] sm:$0xff]
    %v500 = vld [vmem:[#allocation7 + $0x128] sm:$0xff]
    %v501 = vld [vmem:[#allocation7 + $0x130] sm:$0xff]
    %v502 = vld [vmem:[#allocation7 + $0x138] sm:$0xff]
    %v503 = vld [vmem:[#allocation7 + $0x140] sm:$0xff]
    %v504 = vld [vmem:[#allocation7 + $0x148] sm:$0xff]
    %v505 = vld [vmem:[#allocation7 + $0x150] sm:$0xff]
    %v506 = vld [vmem:[#allocation7 + $0x158] sm:$0xff]
    %v507 = vld [vmem:[#allocation7 + $0x160] sm:$0xff]
    %v508 = vld [vmem:[#allocation7 + $0x168] sm:$0xff]
    %v509 = vld [vmem:[#allocation7 + $0x170] sm:$0xff]
    %v510 = vld [vmem:[#allocation7 + $0x178] sm:$0xff]
    %v511 = vld [vmem:[#allocation7 + $0x180] sm:$0xff]
    %v512 = vmul.f32 %v414, %v463
    %v513 = vmul.f32 %v415, %v464
    %v514 = vmul.f32 %v416, %v465
    %v515 = vmul.f32 %v417, %v466
    %v516 = vmul.f32 %v418, %v467
    %v517 = vmul.f32 %v419, %v468
    %v518 = vmul.f32 %v420, %v469
    %v519 = vmul.f32 %v421, %v470
    %v520 = vmul.f32 %v422, %v471
    %v521 = vmul.f32 %v423, %v472
    %v522 = vmul.f32 %v424, %v473
    %v523 = vmul.f32 %v425, %v474
    %v524 = vmul.f32 %v426, %v475
    %v525 = vmul.f32 %v427, %v476
    %v526 = vmul.f32 %v428, %v477
    %v527 = vmul.f32 %v429, %v478
    %v528 = vmul.f32 %v430, %v479
    %v529 = vmul.f32 %v431, %v480
    %v530 = vmul.f32 %v432, %v481
    %v531 = vmul.f32 %v433, %v482
    %v532 = vmul.f32 %v434, %v483
    %v533 = vmul.f32 %v435, %v484
    %v534 = vmul.f32 %v436, %v485
    %v535 = vmul.f32 %v437, %v486
    %v536 = vmul.f32 %v438, %v487
    %v537 = vmul.f32 %v439, %v488
    %v538 = vmul.f32 %v440, %v489
    %v539 = vmul.f32 %v441, %v490
    %v540 = vmul.f32 %v442, %v491
    %v541 = vmul.f32 %v443, %v492
    %v542 = vmul.f32 %v444, %v493
    %v543 = vmul.f32 %v445, %v494
    %v544 = vmul.f32 %v446, %v495
    %v545 = vmul.f32 %v447, %v496
    %v546 = vmul.f32 %v448, %v497
    %v547 = vmul.f32 %v449, %v498
    %v548 = vmul.f32 %v450, %v499
    %v549 = vmul.f32 %v451, %v500
    %v550 = vmul.f32 %v452, %v501
    %v551 = vmul.f32 %v453, %v502
    %v552 = vmul.f32 %v454, %v503
    %v553 = vmul.f32 %v455, %v504
    %v554 = vmul.f32 %v456, %v505
    %v555 = vmul.f32 %v457, %v506
    %v556 = vmul.f32 %v458, %v507
    %v557 = vmul.f32 %v459, %v508
    %v558 = vmul.f32 %v460, %v509
    %v559 = vmul.f32 %v461, %v510
    %v560 = vmul.f32 %v462, %v511
    %561 = vadd.xlane.f32.xlu0 %v512
    %v562 = vpop.xlane.xlu0 %561
    %563 = vadd.xlane.f32.xlu0 %v513
    %v564 = vpop.xlane.xlu0 %563
    %565 = vadd.xlane.f32.xlu0 %v514
    %v566 = vpop.xlane.xlu0 %565
    %567 = vadd.xlane.f32.xlu0 %v515
    %v568 = vpop.xlane.xlu0 %567
    %569 = vadd.xlane.f32.xlu0 %v516
    %v570 = vpop.xlane.xlu0 %569
    %571 = vadd.xlane.f32.xlu0 %v517
    %v572 = vpop.xlane.xlu0 %571
    %573 = vadd.xlane.f32.xlu0 %v518
    %v574 = vpop.xlane.xlu0 %573
    %575 = vadd.xlane.f32.xlu0 %v519
    %v576 = vpop.xlane.xlu0 %575
    %577 = vadd.xlane.f32.xlu0 %v520
    %v578 = vpop.xlane.xlu0 %577
    %579 = vadd.xlane.f32.xlu0 %v521
    %v580 = vpop.xlane.xlu0 %579
    %581 = vadd.xlane.f32.xlu0 %v522
    %v582 = vpop.xlane.xlu0 %581
    %583 = vadd.xlane.f32.xlu0 %v523
    %v584 = vpop.xlane.xlu0 %583
    %585 = vadd.xlane.f32.xlu0 %v524
    %v586 = vpop.xlane.xlu0 %585
    %587 = vadd.xlane.f32.xlu0 %v525
    %v588 = vpop.xlane.xlu0 %587
    %589 = vadd.xlane.f32.xlu0 %v526
    %v590 = vpop.xlane.xlu0 %589
    %591 = vadd.xlane.f32.xlu0 %v527
    %v592 = vpop.xlane.xlu0 %591
    %593 = vadd.xlane.f32.xlu0 %v528
    %v594 = vpop.xlane.xlu0 %593
    %595 = vadd.xlane.f32.xlu0 %v529
    %v596 = vpop.xlane.xlu0 %595
    %597 = vadd.xlane.f32.xlu0 %v530
    %v598 = vpop.xlane.xlu0 %597
    %599 = vadd.xlane.f32.xlu0 %v531
    %v600 = vpop.xlane.xlu0 %599
    %601 = vadd.xlane.f32.xlu0 %v532
    %v602 = vpop.xlane.xlu0 %601
    %603 = vadd.xlane.f32.xlu0 %v533
    %v604 = vpop.xlane.xlu0 %603
    %605 = vadd.xlane.f32.xlu0 %v534
    %v606 = vpop.xlane.xlu0 %605
    %607 = vadd.xlane.f32.xlu0 %v535
    %v608 = vpop.xlane.xlu0 %607
    %609 = vadd.xlane.f32.xlu0 %v536
    %v610 = vpop.xlane.xlu0 %609
    %611 = vadd.xlane.f32.xlu0 %v537
    %v612 = vpop.xlane.xlu0 %611
    %613 = vadd.xlane.f32.xlu0 %v538
    %v614 = vpop.xlane.xlu0 %613
    %615 = vadd.xlane.f32.xlu0 %v539
    %v616 = vpop.xlane.xlu0 %615
    %617 = vadd.xlane.f32.xlu0 %v540
    %v618 = vpop.xlane.xlu0 %617
    %619 = vadd.xlane.f32.xlu0 %v541
    %v620 = vpop.xlane.xlu0 %619
    %621 = vadd.xlane.f32.xlu0 %v542
    %v622 = vpop.xlane.xlu0 %621
    %623 = vadd.xlane.f32.xlu0 %v543
    %v624 = vpop.xlane.xlu0 %623
    %625 = vadd.xlane.f32.xlu0 %v544
    %v626 = vpop.xlane.xlu0 %625
    %627 = vadd.xlane.f32.xlu0 %v545
    %v628 = vpop.xlane.xlu0 %627
    %629 = vadd.xlane.f32.xlu0 %v546
    %v630 = vpop.xlane.xlu0 %629
    %631 = vadd.xlane.f32.xlu0 %v547
    %v632 = vpop.xlane.xlu0 %631
    %633 = vadd.xlane.f32.xlu0 %v548
    %v634 = vpop.xlane.xlu0 %633
    %635 = vadd.xlane.f32.xlu0 %v549
    %v636 = vpop.xlane.xlu0 %635
    %637 = vadd.xlane.f32.xlu0 %v550
    %v638 = vpop.xlane.xlu0 %637
    %639 = vadd.xlane.f32.xlu0 %v551
    %v640 = vpop.xlane.xlu0 %639
    %641 = vadd.xlane.f32.xlu0 %v552
    %v642 = vpop.xlane.xlu0 %641
    %643 = vadd.xlane.f32.xlu0 %v553
    %v644 = vpop.xlane.xlu0 %643
    %645 = vadd.xlane.f32.xlu0 %v554
    %v646 = vpop.xlane.xlu0 %645
    %647 = vadd.xlane.f32.xlu0 %v555
    %v648 = vpop.xlane.xlu0 %647
    %649 = vadd.xlane.f32.xlu0 %v556
    %v650 = vpop.xlane.xlu0 %649
    %651 = vadd.xlane.f32.xlu0 %v557
    %v652 = vpop.xlane.xlu0 %651
    %653 = vadd.xlane.f32.xlu0 %v558
    %v654 = vpop.xlane.xlu0 %653
    %655 = vadd.xlane.f32.xlu0 %v559
    %v656 = vpop.xlane.xlu0 %655
    %657 = vadd.xlane.f32.xlu0 %v560
    %v658 = vpop.xlane.xlu0 %657
    %v659 = vadd.f32 %v562, %v564
    %v660 = vadd.f32 %v659, %v566
    %v661 = vadd.f32 %v660, %v568
    %v662 = vadd.f32 %v661, %v570
    %v663 = vadd.f32 %v662, %v572
    %v664 = vadd.f32 %v663, %v574
    %v665 = vadd.f32 %v664, %v576
    %v666 = vadd.f32 %v665, %v578
    %v667 = vadd.f32 %v666, %v580
    %v668 = vadd.f32 %v667, %v582
    %v669 = vadd.f32 %v668, %v584
    %v670 = vadd.f32 %v669, %v586
    %v671 = vadd.f32 %v670, %v588
    %v672 = vadd.f32 %v671, %v590
    %v673 = vadd.f32 %v672, %v592
    %v674 = vadd.f32 %v673, %v594
    %v675 = vadd.f32 %v674, %v596
    %v676 = vadd.f32 %v675, %v598
    %v677 = vadd.f32 %v676, %v600
    %v678 = vadd.f32 %v677, %v602
    %v679 = vadd.f32 %v678, %v604
    %v680 = vadd.f32 %v679, %v606
    %v681 = vadd.f32 %v680, %v608
    %v682 = vadd.f32 %v681, %v610
    %v683 = vadd.f32 %v682, %v612
    %v684 = vadd.f32 %v683, %v614
    %v685 = vadd.f32 %v684, %v616
    %v686 = vadd.f32 %v685, %v618
    %v687 = vadd.f32 %v686, %v620
    %v688 = vadd.f32 %v687, %v622
    %v689 = vadd.f32 %v688, %v624
    %v690 = vadd.f32 %v689, %v626
    %v691 = vadd.f32 %v690, %v628
    %v692 = vadd.f32 %v691, %v630
    %v693 = vadd.f32 %v692, %v632
    %v694 = vadd.f32 %v693, %v634
    %v695 = vadd.f32 %v694, %v636
    %v696 = vadd.f32 %v695, %v638
    %v697 = vadd.f32 %v696, %v640
    %v698 = vadd.f32 %v697, %v642
    %v699 = vadd.f32 %v698, %v644
    %v700 = vadd.f32 %v699, %v646
    %v701 = vadd.f32 %v700, %v648
    %v702 = vadd.f32 %v701, %v650
    %v703 = vadd.f32 %v702, %v652
    %v704 = vadd.f32 %v703, %v654
    %v705 = vadd.f32 %v704, %v656
    %v706 = vadd.f32 %v705, %v658
    %v707 = vrot.slane %v706, 4
    %v708 = vadd.f32 %v706, %v707
    %v709 = vrot.slane %v708, 2
    %v710 = vadd.f32 %v708, %v709
    %v711 = vrot.slane %v710, 1
    %v712 = vadd.f32 %v710, %v711
    %v713 = vld [vmem:[%s3] sm:$0x1]
    %v714 = vadd.f32 %v712, %v713
    %vm715 = vcmask 0
    %716 = vst.msk [vmem:[#allocation9] sm:$0x1] %vm715, %v714
    %s717 = scalar_lea.vmem [#allocation7], 392
    %v718 = vld [vmem:[%s717] sm:$0xff]
    %v719 = vld [vmem:[%s717 + $0x8] sm:$0xff]
    %v720 = vld [vmem:[%s717 + $0x10] sm:$0xff]
    %v721 = vld [vmem:[%s717 + $0x18] sm:$0xff]
    %v722 = vld [vmem:[%s717 + $0x20] sm:$0xff]
    %v723 = vld [vmem:[%s717 + $0x28] sm:$0xff]
    %v724 = vld [vmem:[%s717 + $0x30] sm:$0xff]
    %v725 = vld [vmem:[%s717 + $0x38] sm:$0xff]
    %v726 = vld [vmem:[%s717 + $0x40] sm:$0xff]
    %v727 = vld [vmem:[%s717 + $0x48] sm:$0xff]
    %v728 = vld [vmem:[%s717 + $0x50] sm:$0xff]
    %v729 = vld [vmem:[%s717 + $0x58] sm:$0xff]
    %v730 = vld [vmem:[%s717 + $0x60] sm:$0xff]
    %v731 = vld [vmem:[%s717 + $0x68] sm:$0xff]
    %v732 = vld [vmem:[%s717 + $0x70] sm:$0xff]
    %v733 = vld [vmem:[%s717 + $0x78] sm:$0xff]
    %v734 = vld [vmem:[%s717 + $0x80] sm:$0xff]
    %v735 = vld [vmem:[%s717 + $0x88] sm:$0xff]
    %v736 = vld [vmem:[%s717 + $0x90] sm:$0xff]
    %v737 = vld [vmem:[%s717 + $0x98] sm:$0xff]
    %v738 = vld [vmem:[%s717 + $0xa0] sm:$0xff]
    %v739 = vld [vmem:[%s717 + $0xa8] sm:$0xff]
    %v740 = vld [vmem:[%s717 + $0xb0] sm:$0xff]
    %v741 = vld [vmem:[%s717 + $0xb8] sm:$0xff]
    %v742 = vld [vmem:[%s717 + $0xc0] sm:$0xff]
    %v743 = vld [vmem:[%s717 + $0xc8] sm:$0xff]
    %v744 = vld [vmem:[%s717 + $0xd0] sm:$0xff]
    %v745 = vld [vmem:[%s717 + $0xd8] sm:$0xff]
    %v746 = vld [vmem:[%s717 + $0xe0] sm:$0xff]
    %v747 = vld [vmem:[%s717 + $0xe8] sm:$0xff]
    %v748 = vld [vmem:[%s717 + $0xf0] sm:$0xff]
    %v749 = vld [vmem:[%s717 + $0xf8] sm:$0xff]
    %v750 = vld [vmem:[%s717 + $0x100] sm:$0xff]
    %v751 = vld [vmem:[%s717 + $0x108] sm:$0xff]
    %v752 = vld [vmem:[%s717 + $0x110] sm:$0xff]
    %v753 = vld [vmem:[%s717 + $0x118] sm:$0xff]
    %v754 = vld [vmem:[%s717 + $0x120] sm:$0xff]
    %v755 = vld [vmem:[%s717 + $0x128] sm:$0xff]
    %v756 = vld [vmem:[%s717 + $0x130] sm:$0xff]
    %v757 = vld [vmem:[%s717 + $0x138] sm:$0xff]
    %v758 = vld [vmem:[%s717 + $0x140] sm:$0xff]
    %v759 = vld [vmem:[%s717 + $0x148] sm:$0xff]
    %v760 = vld [vmem:[%s717 + $0x150] sm:$0xff]
    %v761 = vld [vmem:[%s717 + $0x158] sm:$0xff]
    %v762 = vld [vmem:[%s717 + $0x160] sm:$0xff]
    %v763 = vld [vmem:[%s717 + $0x168] sm:$0xff]
    %v764 = vld [vmem:[%s717 + $0x170] sm:$0xff]
    %v765 = vld [vmem:[%s717 + $0x178] sm:$0xff]
    %v766 = vld [vmem:[%s717 + $0x180] sm:$0xff]
    %v767 = vmul.f32 %v414, %v718
    %v768 = vmul.f32 %v415, %v719
    %v769 = vmul.f32 %v416, %v720
    %v770 = vmul.f32 %v417, %v721
    %v771 = vmul.f32 %v418, %v722
    %v772 = vmul.f32 %v419, %v723
    %v773 = vmul.f32 %v420, %v724
    %v774 = vmul.f32 %v421, %v725
    %v775 = vmul.f32 %v422, %v726
    %v776 = vmul.f32 %v423, %v727
    %v777 = vmul.f32 %v424, %v728
    %v778 = vmul.f32 %v425, %v729
    %v779 = vmul.f32 %v426, %v730
    %v780 = vmul.f32 %v427, %v731
    %v781 = vmul.f32 %v428, %v732
    %v782 = vmul.f32 %v429, %v733
    %v783 = vmul.f32 %v430, %v734
    %v784 = vmul.f32 %v431, %v735
    %v785 = vmul.f32 %v432, %v736
    %v786 = vmul.f32 %v433, %v737
    %v787 = vmul.f32 %v434, %v738
    %v788 = vmul.f32 %v435, %v739
    %v789 = vmul.f32 %v436, %v740
    %v790 = vmul.f32 %v437, %v741
    %v791 = vmul.f32 %v438, %v742
    %v792 = vmul.f32 %v439, %v743
    %v793 = vmul.f32 %v440, %v744
    %v794 = vmul.f32 %v441, %v745
    %v795 = vmul.f32 %v442, %v746
    %v796 = vmul.f32 %v443, %v747
    %v797 = vmul.f32 %v444, %v748
    %v798 = vmul.f32 %v445, %v749
    %v799 = vmul.f32 %v446, %v750
    %v800 = vmul.f32 %v447, %v751
    %v801 = vmul.f32 %v448, %v752
    %v802 = vmul.f32 %v449, %v753
    %v803 = vmul.f32 %v450, %v754
    %v804 = vmul.f32 %v451, %v755
    %v805 = vmul.f32 %v452, %v756
    %v806 = vmul.f32 %v453, %v757
    %v807 = vmul.f32 %v454, %v758
    %v808 = vmul.f32 %v455, %v759
    %v809 = vmul.f32 %v456, %v760
    %v810 = vmul.f32 %v457, %v761
    %v811 = vmul.f32 %v458, %v762
    %v812 = vmul.f32 %v459, %v763
    %v813 = vmul.f32 %v460, %v764
    %v814 = vmul.f32 %v461, %v765
    %v815 = vmul.f32 %v462, %v766
    %816 = vadd.xlane.f32.xlu0 %v767
    %v817 = vpop.xlane.xlu0 %816
    %818 = vadd.xlane.f32.xlu0 %v768
    %v819 = vpop.xlane.xlu0 %818
    %820 = vadd.xlane.f32.xlu0 %v769
    %v821 = vpop.xlane.xlu0 %820
    %822 = vadd.xlane.f32.xlu0 %v770
    %v823 = vpop.xlane.xlu0 %822
    %824 = vadd.xlane.f32.xlu0 %v771
    %v825 = vpop.xlane.xlu0 %824
    %826 = vadd.xlane.f32.xlu0 %v772
    %v827 = vpop.xlane.xlu0 %826
    %828 = vadd.xlane.f32.xlu0 %v773
    %v829 = vpop.xlane.xlu0 %828
    %830 = vadd.xlane.f32.xlu0 %v774
    %v831 = vpop.xlane.xlu0 %830
    %832 = vadd.xlane.f32.xlu0 %v775
    %v833 = vpop.xlane.xlu0 %832
    %834 = vadd.xlane.f32.xlu0 %v776
    %v835 = vpop.xlane.xlu0 %834
    %836 = vadd.xlane.f32.xlu0 %v777
    %v837 = vpop.xlane.xlu0 %836
    %838 = vadd.xlane.f32.xlu0 %v778
    %v839 = vpop.xlane.xlu0 %838
    %840 = vadd.xlane.f32.xlu0 %v779
    %v841 = vpop.xlane.xlu0 %840
    %842 = vadd.xlane.f32.xlu0 %v780
    %v843 = vpop.xlane.xlu0 %842
    %844 = vadd.xlane.f32.xlu0 %v781
    %v845 = vpop.xlane.xlu0 %844
    %846 = vadd.xlane.f32.xlu0 %v782
    %v847 = vpop.xlane.xlu0 %846
    %848 = vadd.xlane.f32.xlu0 %v783
    %v849 = vpop.xlane.xlu0 %848
    %850 = vadd.xlane.f32.xlu0 %v784
    %v851 = vpop.xlane.xlu0 %850
    %852 = vadd.xlane.f32.xlu0 %v785
    %v853 = vpop.xlane.xlu0 %852
    %854 = vadd.xlane.f32.xlu0 %v786
    %v855 = vpop.xlane.xlu0 %854
    %856 = vadd.xlane.f32.xlu0 %v787
    %v857 = vpop.xlane.xlu0 %856
    %858 = vadd.xlane.f32.xlu0 %v788
    %v859 = vpop.xlane.xlu0 %858
    %860 = vadd.xlane.f32.xlu0 %v789
    %v861 = vpop.xlane.xlu0 %860
    %862 = vadd.xlane.f32.xlu0 %v790
    %v863 = vpop.xlane.xlu0 %862
    %864 = vadd.xlane.f32.xlu0 %v791
    %v865 = vpop.xlane.xlu0 %864
    %866 = vadd.xlane.f32.xlu0 %v792
    %v867 = vpop.xlane.xlu0 %866
    %868 = vadd.xlane.f32.xlu0 %v793
    %v869 = vpop.xlane.xlu0 %868
    %870 = vadd.xlane.f32.xlu0 %v794
    %v871 = vpop.xlane.xlu0 %870
    %872 = vadd.xlane.f32.xlu0 %v795
    %v873 = vpop.xlane.xlu0 %872
    %874 = vadd.xlane.f32.xlu0 %v796
    %v875 = vpop.xlane.xlu0 %874
    %876 = vadd.xlane.f32.xlu0 %v797
    %v877 = vpop.xlane.xlu0 %876
    %878 = vadd.xlane.f32.xlu0 %v798
    %v879 = vpop.xlane.xlu0 %878
    %880 = vadd.xlane.f32.xlu0 %v799
    %v881 = vpop.xlane.xlu0 %880
    %882 = vadd.xlane.f32.xlu0 %v800
    %v883 = vpop.xlane.xlu0 %882
    %884 = vadd.xlane.f32.xlu0 %v801
    %v885 = vpop.xlane.xlu0 %884
    %886 = vadd.xlane.f32.xlu0 %v802
    %v887 = vpop.xlane.xlu0 %886
    %888 = vadd.xlane.f32.xlu0 %v803
    %v889 = vpop.xlane.xlu0 %888
    %890 = vadd.xlane.f32.xlu0 %v804
    %v891 = vpop.xlane.xlu0 %890
    %892 = vadd.xlane.f32.xlu0 %v805
    %v893 = vpop.xlane.xlu0 %892
    %894 = vadd.xlane.f32.xlu0 %v806
    %v895 = vpop.xlane.xlu0 %894
    %896 = vadd.xlane.f32.xlu0 %v807
    %v897 = vpop.xlane.xlu0 %896
    %898 = vadd.xlane.f32.xlu0 %v808
    %v899 = vpop.xlane.xlu0 %898
    %900 = vadd.xlane.f32.xlu0 %v809
    %v901 = vpop.xlane.xlu0 %900
    %902 = vadd.xlane.f32.xlu0 %v810
    %v903 = vpop.xlane.xlu0 %902
    %904 = vadd.xlane.f32.xlu0 %v811
    %v905 = vpop.xlane.xlu0 %904
    %906 = vadd.xlane.f32.xlu0 %v812
    %v907 = vpop.xlane.xlu0 %906
    %908 = vadd.xlane.f32.xlu0 %v813
    %v909 = vpop.xlane.xlu0 %908
    %910 = vadd.xlane.f32.xlu0 %v814
    %v911 = vpop.xlane.xlu0 %910
    %912 = vadd.xlane.f32.xlu0 %v815
    %v913 = vpop.xlane.xlu0 %912
    %v914 = vadd.f32 %v817, %v819
    %v915 = vadd.f32 %v914, %v821
    %v916 = vadd.f32 %v915, %v823
    %v917 = vadd.f32 %v916, %v825
    %v918 = vadd.f32 %v917, %v827
    %v919 = vadd.f32 %v918, %v829
    %v920 = vadd.f32 %v919, %v831
    %v921 = vadd.f32 %v920, %v833
    %v922 = vadd.f32 %v921, %v835
    %v923 = vadd.f32 %v922, %v837
    %v924 = vadd.f32 %v923, %v839
    %v925 = vadd.f32 %v924, %v841
    %v926 = vadd.f32 %v925, %v843
    %v927 = vadd.f32 %v926, %v845
    %v928 = vadd.f32 %v927, %v847
    %v929 = vadd.f32 %v928, %v849
    %v930 = vadd.f32 %v929, %v851
    %v931 = vadd.f32 %v930, %v853
    %v932 = vadd.f32 %v931, %v855
    %v933 = vadd.f32 %v932, %v857
    %v934 = vadd.f32 %v933, %v859
    %v935 = vadd.f32 %v934, %v861
    %v936 = vadd.f32 %v935, %v863
    %v937 = vadd.f32 %v936, %v865
    %v938 = vadd.f32 %v937, %v867
    %v939 = vadd.f32 %v938, %v869
    %v940 = vadd.f32 %v939, %v871
    %v941 = vadd.f32 %v940, %v873
    %v942 = vadd.f32 %v941, %v875
    %v943 = vadd.f32 %v942, %v877
    %v944 = vadd.f32 %v943, %v879
    %v945 = vadd.f32 %v944, %v881
    %v946 = vadd.f32 %v945, %v883
    %v947 = vadd.f32 %v946, %v885
    %v948 = vadd.f32 %v947, %v887
    %v949 = vadd.f32 %v948, %v889
    %v950 = vadd.f32 %v949, %v891
    %v951 = vadd.f32 %v950, %v893
    %v952 = vadd.f32 %v951, %v895
    %v953 = vadd.f32 %v952, %v897
    %v954 = vadd.f32 %v953, %v899
    %v955 = vadd.f32 %v954, %v901
    %v956 = vadd.f32 %v955, %v903
    %v957 = vadd.f32 %v956, %v905
    %v958 = vadd.f32 %v957, %v907
    %v959 = vadd.f32 %v958, %v909
    %v960 = vadd.f32 %v959, %v911
    %v961 = vadd.f32 %v960, %v913
    %v962 = vrot.slane %v961, 4
    %v963 = vadd.f32 %v961, %v962
    %v964 = vrot.slane %v963, 2
    %v965 = vadd.f32 %v963, %v964
    %v966 = vrot.slane %v965, 1
    %v967 = vadd.f32 %v965, %v966
    %v968 = vld [vmem:[%s3] sm:$0x1]
    %v969 = vadd.f32 %v967, %v968
    %vm970 = vcmask 8200
    %971 = vst.msk [vmem:[#allocation9] sm:$0x1] %vm970, %v969
    %s972 = scalar_lea.vmem [#allocation7], 784
    %v973 = vld [vmem:[%s972] sm:$0xff]
    %v974 = vld [vmem:[%s972 + $0x8] sm:$0xff]
    %v975 = vld [vmem:[%s972 + $0x10] sm:$0xff]
    %v976 = vld [vmem:[%s972 + $0x18] sm:$0xff]
    %v977 = vld [vmem:[%s972 + $0x20] sm:$0xff]
    %v978 = vld [vmem:[%s972 + $0x28] sm:$0xff]
    %v979 = vld [vmem:[%s972 + $0x30] sm:$0xff]
    %v980 = vld [vmem:[%s972 + $0x38] sm:$0xff]
    %v981 = vld [vmem:[%s972 + $0x40] sm:$0xff]
    %v982 = vld [vmem:[%s972 + $0x48] sm:$0xff]
    %v983 = vld [vmem:[%s972 + $0x50] sm:$0xff]
    %v984 = vld [vmem:[%s972 + $0x58] sm:$0xff]
    %v985 = vld [vmem:[%s972 + $0x60] sm:$0xff]
    %v986 = vld [vmem:[%s972 + $0x68] sm:$0xff]
    %v987 = vld [vmem:[%s972 + $0x70] sm:$0xff]
    %v988 = vld [vmem:[%s972 + $0x78] sm:$0xff]
    %v989 = vld [vmem:[%s972 + $0x80] sm:$0xff]
    %v990 = vld [vmem:[%s972 + $0x88] sm:$0xff]
    %v991 = vld [vmem:[%s972 + $0x90] sm:$0xff]
    %v992 = vld [vmem:[%s972 + $0x98] sm:$0xff]
    %v993 = vld [vmem:[%s972 + $0xa0] sm:$0xff]
    %v994 = vld [vmem:[%s972 + $0xa8] sm:$0xff]
    %v995 = vld [vmem:[%s972 + $0xb0] sm:$0xff]
    %v996 = vld [vmem:[%s972 + $0xb8] sm:$0xff]
    %v997 = vld [vmem:[%s972 + $0xc0] sm:$0xff]
    %v998 = vld [vmem:[%s972 + $0xc8] sm:$0xff]
    %v999 = vld [vmem:[%s972 + $0xd0] sm:$0xff]
    %v1000 = vld [vmem:[%s972 + $0xd8] sm:$0xff]
    %v1001 = vld [vmem:[%s972 + $0xe0] sm:$0xff]
    %v1002 = vld [vmem:[%s972 + $0xe8] sm:$0xff]
    %v1003 = vld [vmem:[%s972 + $0xf0] sm:$0xff]
    %v1004 = vld [vmem:[%s972 + $0xf8] sm:$0xff]
    %v1005 = vld [vmem:[%s972 + $0x100] sm:$0xff]
    %v1006 = vld [vmem:[%s972 + $0x108] sm:$0xff]
    %v1007 = vld [vmem:[%s972 + $0x110] sm:$0xff]
    %v1008 = vld [vmem:[%s972 + $0x118] sm:$0xff]
    %v1009 = vld [vmem:[%s972 + $0x120] sm:$0xff]
    %v1010 = vld [vmem:[%s972 + $0x128] sm:$0xff]
    %v1011 = vld [vmem:[%s972 + $0x130] sm:$0xff]
    %v1012 = vld [vmem:[%s972 + $0x138] sm:$0xff]
    %v1013 = vld [vmem:[%s972 + $0x140] sm:$0xff]
    %v1014 = vld [vmem:[%s972 + $0x148] sm:$0xff]
    %v1015 = vld [vmem:[%s972 + $0x150] sm:$0xff]
    %v1016 = vld [vmem:[%s972 + $0x158] sm:$0xff]
    %v1017 = vld [vmem:[%s972 + $0x160] sm:$0xff]
    %v1018 = vld [vmem:[%s972 + $0x168] sm:$0xff]
    %v1019 = vld [vmem:[%s972 + $0x170] sm:$0xff]
    %v1020 = vld [vmem:[%s972 + $0x178] sm:$0xff]
    %v1021 = vld [vmem:[%s972 + $0x180] sm:$0xff]
    %v1022 = vmul.f32 %v414, %v973
    %v1023 = vmul.f32 %v415, %v974
    %v1024 = vmul.f32 %v416, %v975
    %v1025 = vmul.f32 %v417, %v976
    %v1026 = vmul.f32 %v418, %v977
    %v1027 = vmul.f32 %v419, %v978
    %v1028 = vmul.f32 %v420, %v979
    %v1029 = vmul.f32 %v421, %v980
    %v1030 = vmul.f32 %v422, %v981
    %v1031 = vmul.f32 %v423, %v982
    %v1032 = vmul.f32 %v424, %v983
    %v1033 = vmul.f32 %v425, %v984
    %v1034 = vmul.f32 %v426, %v985
    %v1035 = vmul.f32 %v427, %v986
    %v1036 = vmul.f32 %v428, %v987
    %v1037 = vmul.f32 %v429, %v988
    %v1038 = vmul.f32 %v430, %v989
    %v1039 = vmul.f32 %v431, %v990
    %v1040 = vmul.f32 %v432, %v991
    %v1041 = vmul.f32 %v433, %v992
    %v1042 = vmul.f32 %v434, %v993
    %v1043 = vmul.f32 %v435, %v994
    %v1044 = vmul.f32 %v436, %v995
    %v1045 = vmul.f32 %v437, %v996
    %v1046 = vmul.f32 %v438, %v997
    %v1047 = vmul.f32 %v439, %v998
    %v1048 = vmul.f32 %v440, %v999
    %v1049 = vmul.f32 %v441, %v1000
    %v1050 = vmul.f32 %v442, %v1001
    %v1051 = vmul.f32 %v443, %v1002
    %v1052 = vmul.f32 %v444, %v1003
    %v1053 = vmul.f32 %v445, %v1004
    %v1054 = vmul.f32 %v446, %v1005
    %v1055 = vmul.f32 %v447, %v1006
    %v1056 = vmul.f32 %v448, %v1007
    %v1057 = vmul.f32 %v449, %v1008
    %v1058 = vmul.f32 %v450, %v1009
    %v1059 = vmul.f32 %v451, %v1010
    %v1060 = vmul.f32 %v452, %v1011
    %v1061 = vmul.f32 %v453, %v1012
    %v1062 = vmul.f32 %v454, %v1013
    %v1063 = vmul.f32 %v455, %v1014
    %v1064 = vmul.f32 %v456, %v1015
    %v1065 = vmul.f32 %v457, %v1016
    %v1066 = vmul.f32 %v458, %v1017
    %v1067 = vmul.f32 %v459, %v1018
    %v1068 = vmul.f32 %v460, %v1019
    %v1069 = vmul.f32 %v461, %v1020
    %v1070 = vmul.f32 %v462, %v1021
    %1071 = vadd.xlane.f32.xlu0 %v1022
    %v1072 = vpop.xlane.xlu0 %1071
    %1073 = vadd.xlane.f32.xlu0 %v1023
    %v1074 = vpop.xlane.xlu0 %1073
    %1075 = vadd.xlane.f32.xlu0 %v1024
    %v1076 = vpop.xlane.xlu0 %1075
    %1077 = vadd.xlane.f32.xlu0 %v1025
    %v1078 = vpop.xlane.xlu0 %1077
    %1079 = vadd.xlane.f32.xlu0 %v1026
    %v1080 = vpop.xlane.xlu0 %1079
    %1081 = vadd.xlane.f32.xlu0 %v1027
    %v1082 = vpop.xlane.xlu0 %1081
    %1083 = vadd.xlane.f32.xlu0 %v1028
    %v1084 = vpop.xlane.xlu0 %1083
    %1085 = vadd.xlane.f32.xlu0 %v1029
    %v1086 = vpop.xlane.xlu0 %1085
    %1087 = vadd.xlane.f32.xlu0 %v1030
    %v1088 = vpop.xlane.xlu0 %1087
    %1089 = vadd.xlane.f32.xlu0 %v1031
    %v1090 = vpop.xlane.xlu0 %1089
    %1091 = vadd.xlane.f32.xlu0 %v1032
    %v1092 = vpop.xlane.xlu0 %1091
    %1093 = vadd.xlane.f32.xlu0 %v1033
    %v1094 = vpop.xlane.xlu0 %1093
    %1095 = vadd.xlane.f32.xlu0 %v1034
    %v1096 = vpop.xlane.xlu0 %1095
    %1097 = vadd.xlane.f32.xlu0 %v1035
    %v1098 = vpop.xlane.xlu0 %1097
    %1099 = vadd.xlane.f32.xlu0 %v1036
    %v1100 = vpop.xlane.xlu0 %1099
    %1101 = vadd.xlane.f32.xlu0 %v1037
    %v1102 = vpop.xlane.xlu0 %1101
    %1103 = vadd.xlane.f32.xlu0 %v1038
    %v1104 = vpop.xlane.xlu0 %1103
    %1105 = vadd.xlane.f32.xlu0 %v1039
    %v1106 = vpop.xlane.xlu0 %1105
    %1107 = vadd.xlane.f32.xlu0 %v1040
    %v1108 = vpop.xlane.xlu0 %1107
    %1109 = vadd.xlane.f32.xlu0 %v1041
    %v1110 = vpop.xlane.xlu0 %1109
    %1111 = vadd.xlane.f32.xlu0 %v1042
    %v1112 = vpop.xlane.xlu0 %1111
    %1113 = vadd.xlane.f32.xlu0 %v1043
    %v1114 = vpop.xlane.xlu0 %1113
    %1115 = vadd.xlane.f32.xlu0 %v1044
    %v1116 = vpop.xlane.xlu0 %1115
    %1117 = vadd.xlane.f32.xlu0 %v1045
    %v1118 = vpop.xlane.xlu0 %1117
    %1119 = vadd.xlane.f32.xlu0 %v1046
    %v1120 = vpop.xlane.xlu0 %1119
    %1121 = vadd.xlane.f32.xlu0 %v1047
    %v1122 = vpop.xlane.xlu0 %1121
    %1123 = vadd.xlane.f32.xlu0 %v1048
    %v1124 = vpop.xlane.xlu0 %1123
    %1125 = vadd.xlane.f32.xlu0 %v1049
    %v1126 = vpop.xlane.xlu0 %1125
    %1127 = vadd.xlane.f32.xlu0 %v1050
    %v1128 = vpop.xlane.xlu0 %1127
    %1129 = vadd.xlane.f32.xlu0 %v1051
    %v1130 = vpop.xlane.xlu0 %1129
    %1131 = vadd.xlane.f32.xlu0 %v1052
    %v1132 = vpop.xlane.xlu0 %1131
    %1133 = vadd.xlane.f32.xlu0 %v1053
    %v1134 = vpop.xlane.xlu0 %1133
    %1135 = vadd.xlane.f32.xlu0 %v1054
    %v1136 = vpop.xlane.xlu0 %1135
    %1137 = vadd.xlane.f32.xlu0 %v1055
    %v1138 = vpop.xlane.xlu0 %1137
    %1139 = vadd.xlane.f32.xlu0 %v1056
    %v1140 = vpop.xlane.xlu0 %1139
    %1141 = vadd.xlane.f32.xlu0 %v1057
    %v1142 = vpop.xlane.xlu0 %1141
    %1143 = vadd.xlane.f32.xlu0 %v1058
    %v1144 = vpop.xlane.xlu0 %1143
    %1145 = vadd.xlane.f32.xlu0 %v1059
    %v1146 = vpop.xlane.xlu0 %1145
    %1147 = vadd.xlane.f32.xlu0 %v1060
    %v1148 = vpop.xlane.xlu0 %1147
    %1149 = vadd.xlane.f32.xlu0 %v1061
    %v1150 = vpop.xlane.xlu0 %1149
    %1151 = vadd.xlane.f32.xlu0 %v1062
    %v1152 = vpop.xlane.xlu0 %1151
    %1153 = vadd.xlane.f32.xlu0 %v1063
    %v1154 = vpop.xlane.xlu0 %1153
    %1155 = vadd.xlane.f32.xlu0 %v1064
    %v1156 = vpop.xlane.xlu0 %1155
    %1157 = vadd.xlane.f32.xlu0 %v1065
    %v1158 = vpop.xlane.xlu0 %1157
    %1159 = vadd.xlane.f32.xlu0 %v1066
    %v1160 = vpop.xlane.xlu0 %1159
    %1161 = vadd.xlane.f32.xlu0 %v1067
    %v1162 = vpop.xlane.xlu0 %1161
    %1163 = vadd.xlane.f32.xlu0 %v1068
    %v1164 = vpop.xlane.xlu0 %1163
    %1165 = vadd.xlane.f32.xlu0 %v1069
    %v1166 = vpop.xlane.xlu0 %1165
    %1167 = vadd.xlane.f32.xlu0 %v1070
    %v1168 = vpop.xlane.xlu0 %1167
    %v1169 = vadd.f32 %v1072, %v1074
    %v1170 = vadd.f32 %v1169, %v1076
    %v1171 = vadd.f32 %v1170, %v1078
    %v1172 = vadd.f32 %v1171, %v1080
    %v1173 = vadd.f32 %v1172, %v1082
    %v1174 = vadd.f32 %v1173, %v1084
    %v1175 = vadd.f32 %v1174, %v1086
    %v1176 = vadd.f32 %v1175, %v1088
    %v1177 = vadd.f32 %v1176, %v1090
    %v1178 = vadd.f32 %v1177, %v1092
    %v1179 = vadd.f32 %v1178, %v1094
    %v1180 = vadd.f32 %v1179, %v1096
    %v1181 = vadd.f32 %v1180, %v1098
    %v1182 = vadd.f32 %v1181, %v1100
    %v1183 = vadd.f32 %v1182, %v1102
    %v1184 = vadd.f32 %v1183, %v1104
    %v1185 = vadd.f32 %v1184, %v1106
    %v1186 = vadd.f32 %v1185, %v1108
    %v1187 = vadd.f32 %v1186, %v1110
    %v1188 = vadd.f32 %v1187, %v1112
    %v1189 = vadd.f32 %v1188, %v1114
    %v1190 = vadd.f32 %v1189, %v1116
    %v1191 = vadd.f32 %v1190, %v1118
    %v1192 = vadd.f32 %v1191, %v1120
    %v1193 = vadd.f32 %v1192, %v1122
    %v1194 = vadd.f32 %v1193, %v1124
    %v1195 = vadd.f32 %v1194, %v1126
    %v1196 = vadd.f32 %v1195, %v1128
    %v1197 = vadd.f32 %v1196, %v1130
    %v1198 = vadd.f32 %v1197, %v1132
    %v1199 = vadd.f32 %v1198, %v1134
    %v1200 = vadd.f32 %v1199, %v1136
    %v1201 = vadd.f32 %v1200, %v1138
    %v1202 = vadd.f32 %v1201, %v1140
    %v1203 = vadd.f32 %v1202, %v1142
    %v1204 = vadd.f32 %v1203, %v1144
    %v1205 = vadd.f32 %v1204, %v1146
    %v1206 = vadd.f32 %v1205, %v1148
    %v1207 = vadd.f32 %v1206, %v1150
    %v1208 = vadd.f32 %v1207, %v1152
    %v1209 = vadd.f32 %v1208, %v1154
    %v1210 = vadd.f32 %v1209, %v1156
    %v1211 = vadd.f32 %v1210, %v1158
    %v1212 = vadd.f32 %v1211, %v1160
    %v1213 = vadd.f32 %v1212, %v1162
    %v1214 = vadd.f32 %v1213, %v1164
    %v1215 = vadd.f32 %v1214, %v1166
    %v1216 = vadd.f32 %v1215, %v1168
    %v1217 = vrot.slane %v1216, 4
    %v1218 = vadd.f32 %v1216, %v1217
    %v1219 = vrot.slane %v1218, 2
    %v1220 = vadd.f32 %v1218, %v1219
    %v1221 = vrot.slane %v1220, 1
    %v1222 = vadd.f32 %v1220, %v1221
    %v1223 = vld [vmem:[%s3] sm:$0x1]
    %v1224 = vadd.f32 %v1222, %v1223
    %vm1225 = vcmask 16400
    %1226 = vst.msk [vmem:[#allocation9] sm:$0x1] %vm1225, %v1224
    %s1227 = scalar_lea.vmem [#allocation7], 1176
    %v1228 = vld [vmem:[%s1227] sm:$0xff]
    %v1229 = vld [vmem:[%s1227 + $0x8] sm:$0xff]
    %v1230 = vld [vmem:[%s1227 + $0x10] sm:$0xff]
    %v1231 = vld [vmem:[%s1227 + $0x18] sm:$0xff]
    %v1232 = vld [vmem:[%s1227 + $0x20] sm:$0xff]
    %v1233 = vld [vmem:[%s1227 + $0x28] sm:$0xff]
    %v1234 = vld [vmem:[%s1227 + $0x30] sm:$0xff]
    %v1235 = vld [vmem:[%s1227 + $0x38] sm:$0xff]
    %v1236 = vld [vmem:[%s1227 + $0x40] sm:$0xff]
    %v1237 = vld [vmem:[%s1227 + $0x48] sm:$0xff]
    %v1238 = vld [vmem:[%s1227 + $0x50] sm:$0xff]
    %v1239 = vld [vmem:[%s1227 + $0x58] sm:$0xff]
    %v1240 = vld [vmem:[%s1227 + $0x60] sm:$0xff]
    %v1241 = vld [vmem:[%s1227 + $0x68] sm:$0xff]
    %v1242 = vld [vmem:[%s1227 + $0x70] sm:$0xff]
    %v1243 = vld [vmem:[%s1227 + $0x78] sm:$0xff]
    %v1244 = vld [vmem:[%s1227 + $0x80] sm:$0xff]
    %v1245 = vld [vmem:[%s1227 + $0x88] sm:$0xff]
    %v1246 = vld [vmem:[%s1227 + $0x90] sm:$0xff]
    %v1247 = vld [vmem:[%s1227 + $0x98] sm:$0xff]
    %v1248 = vld [vmem:[%s1227 + $0xa0] sm:$0xff]
    %v1249 = vld [vmem:[%s1227 + $0xa8] sm:$0xff]
    %v1250 = vld [vmem:[%s1227 + $0xb0] sm:$0xff]
    %v1251 = vld [vmem:[%s1227 + $0xb8] sm:$0xff]
    %v1252 = vld [vmem:[%s1227 + $0xc0] sm:$0xff]
    %v1253 = vld [vmem:[%s1227 + $0xc8] sm:$0xff]
    %v1254 = vld [vmem:[%s1227 + $0xd0] sm:$0xff]
    %v1255 = vld [vmem:[%s1227 + $0xd8] sm:$0xff]
    %v1256 = vld [vmem:[%s1227 + $0xe0] sm:$0xff]
    %v1257 = vld [vmem:[%s1227 + $0xe8] sm:$0xff]
    %v1258 = vld [vmem:[%s1227 + $0xf0] sm:$0xff]
    %v1259 = vld [vmem:[%s1227 + $0xf8] sm:$0xff]
    %v1260 = vld [vmem:[%s1227 + $0x100] sm:$0xff]
    %v1261 = vld [vmem:[%s1227 + $0x108] sm:$0xff]
    %v1262 = vld [vmem:[%s1227 + $0x110] sm:$0xff]
    %v1263 = vld [vmem:[%s1227 + $0x118] sm:$0xff]
    %v1264 = vld [vmem:[%s1227 + $0x120] sm:$0xff]
    %v1265 = vld [vmem:[%s1227 + $0x128] sm:$0xff]
    %v1266 = vld [vmem:[%s1227 + $0x130] sm:$0xff]
    %v1267 = vld [vmem:[%s1227 + $0x138] sm:$0xff]
    %v1268 = vld [vmem:[%s1227 + $0x140] sm:$0xff]
    %v1269 = vld [vmem:[%s1227 + $0x148] sm:$0xff]
    %v1270 = vld [vmem:[%s1227 + $0x150] sm:$0xff]
    %v1271 = vld [vmem:[%s1227 + $0x158] sm:$0xff]
    %v1272 = vld [vmem:[%s1227 + $0x160] sm:$0xff]
    %v1273 = vld [vmem:[%s1227 + $0x168] sm:$0xff]
    %v1274 = vld [vmem:[%s1227 + $0x170] sm:$0xff]
    %v1275 = vld [vmem:[%s1227 + $0x178] sm:$0xff]
    %v1276 = vld [vmem:[%s1227 + $0x180] sm:$0xff]
    %v1277 = vmul.f32 %v414, %v1228
    %v1278 = vmul.f32 %v415, %v1229
    %v1279 = vmul.f32 %v416, %v1230
    %v1280 = vmul.f32 %v417, %v1231
    %v1281 = vmul.f32 %v418, %v1232
    %v1282 = vmul.f32 %v419, %v1233
    %v1283 = vmul.f32 %v420, %v1234
    %v1284 = vmul.f32 %v421, %v1235
    %v1285 = vmul.f32 %v422, %v1236
    %v1286 = vmul.f32 %v423, %v1237
    %v1287 = vmul.f32 %v424, %v1238
    %v1288 = vmul.f32 %v425, %v1239
    %v1289 = vmul.f32 %v426, %v1240
    %v1290 = vmul.f32 %v427, %v1241
    %v1291 = vmul.f32 %v428, %v1242
    %v1292 = vmul.f32 %v429, %v1243
    %v1293 = vmul.f32 %v430, %v1244
    %v1294 = vmul.f32 %v431, %v1245
    %v1295 = vmul.f32 %v432, %v1246
    %v1296 = vmul.f32 %v433, %v1247
    %v1297 = vmul.f32 %v434, %v1248
    %v1298 = vmul.f32 %v435, %v1249
    %v1299 = vmul.f32 %v436, %v1250
    %v1300 = vmul.f32 %v437, %v1251
    %v1301 = vmul.f32 %v438, %v1252
    %v1302 = vmul.f32 %v439, %v1253
    %v1303 = vmul.f32 %v440, %v1254
    %v1304 = vmul.f32 %v441, %v1255
    %v1305 = vmul.f32 %v442, %v1256
    %v1306 = vmul.f32 %v443, %v1257
    %v1307 = vmul.f32 %v444, %v1258
    %v1308 = vmul.f32 %v445, %v1259
    %v1309 = vmul.f32 %v446, %v1260
    %v1310 = vmul.f32 %v447, %v1261
    %v1311 = vmul.f32 %v448, %v1262
    %v1312 = vmul.f32 %v449, %v1263
    %v1313 = vmul.f32 %v450, %v1264
    %v1314 = vmul.f32 %v451, %v1265
    %v1315 = vmul.f32 %v452, %v1266
    %v1316 = vmul.f32 %v453, %v1267
    %v1317 = vmul.f32 %v454, %v1268
    %v1318 = vmul.f32 %v455, %v1269
    %v1319 = vmul.f32 %v456, %v1270
    %v1320 = vmul.f32 %v457, %v1271
    %v1321 = vmul.f32 %v458, %v1272
    %v1322 = vmul.f32 %v459, %v1273
    %v1323 = vmul.f32 %v460, %v1274
    %v1324 = vmul.f32 %v461, %v1275
    %v1325 = vmul.f32 %v462, %v1276
    %1326 = vadd.xlane.f32.xlu0 %v1277
    %v1327 = vpop.xlane.xlu0 %1326
    %1328 = vadd.xlane.f32.xlu0 %v1278
    %v1329 = vpop.xlane.xlu0 %1328
    %1330 = vadd.xlane.f32.xlu0 %v1279
    %v1331 = vpop.xlane.xlu0 %1330
    %1332 = vadd.xlane.f32.xlu0 %v1280
    %v1333 = vpop.xlane.xlu0 %1332
    %1334 = vadd.xlane.f32.xlu0 %v1281
    %v1335 = vpop.xlane.xlu0 %1334
    %1336 = vadd.xlane.f32.xlu0 %v1282
    %v1337 = vpop.xlane.xlu0 %1336
    %1338 = vadd.xlane.f32.xlu0 %v1283
    %v1339 = vpop.xlane.xlu0 %1338
    %1340 = vadd.xlane.f32.xlu0 %v1284
    %v1341 = vpop.xlane.xlu0 %1340
    %1342 = vadd.xlane.f32.xlu0 %v1285
    %v1343 = vpop.xlane.xlu0 %1342
    %1344 = vadd.xlane.f32.xlu0 %v1286
    %v1345 = vpop.xlane.xlu0 %1344
    %1346 = vadd.xlane.f32.xlu0 %v1287
    %v1347 = vpop.xlane.xlu0 %1346
    %1348 = vadd.xlane.f32.xlu0 %v1288
    %v1349 = vpop.xlane.xlu0 %1348
    %1350 = vadd.xlane.f32.xlu0 %v1289
    %v1351 = vpop.xlane.xlu0 %1350
    %1352 = vadd.xlane.f32.xlu0 %v1290
    %v1353 = vpop.xlane.xlu0 %1352
    %1354 = vadd.xlane.f32.xlu0 %v1291
    %v1355 = vpop.xlane.xlu0 %1354
    %1356 = vadd.xlane.f32.xlu0 %v1292
    %v1357 = vpop.xlane.xlu0 %1356
    %1358 = vadd.xlane.f32.xlu0 %v1293
    %v1359 = vpop.xlane.xlu0 %1358
    %1360 = vadd.xlane.f32.xlu0 %v1294
    %v1361 = vpop.xlane.xlu0 %1360
    %1362 = vadd.xlane.f32.xlu0 %v1295
    %v1363 = vpop.xlane.xlu0 %1362
    %1364 = vadd.xlane.f32.xlu0 %v1296
    %v1365 = vpop.xlane.xlu0 %1364
    %1366 = vadd.xlane.f32.xlu0 %v1297
    %v1367 = vpop.xlane.xlu0 %1366
    %1368 = vadd.xlane.f32.xlu0 %v1298
    %v1369 = vpop.xlane.xlu0 %1368
    %1370 = vadd.xlane.f32.xlu0 %v1299
    %v1371 = vpop.xlane.xlu0 %1370
    %1372 = vadd.xlane.f32.xlu0 %v1300
    %v1373 = vpop.xlane.xlu0 %1372
    %1374 = vadd.xlane.f32.xlu0 %v1301
    %v1375 = vpop.xlane.xlu0 %1374
    %1376 = vadd.xlane.f32.xlu0 %v1302
    %v1377 = vpop.xlane.xlu0 %1376
    %1378 = vadd.xlane.f32.xlu0 %v1303
    %v1379 = vpop.xlane.xlu0 %1378
    %1380 = vadd.xlane.f32.xlu0 %v1304
    %v1381 = vpop.xlane.xlu0 %1380
    %1382 = vadd.xlane.f32.xlu0 %v1305
    %v1383 = vpop.xlane.xlu0 %1382
    %1384 = vadd.xlane.f32.xlu0 %v1306
    %v1385 = vpop.xlane.xlu0 %1384
    %1386 = vadd.xlane.f32.xlu0 %v1307
    %v1387 = vpop.xlane.xlu0 %1386
    %1388 = vadd.xlane.f32.xlu0 %v1308
    %v1389 = vpop.xlane.xlu0 %1388
    %1390 = vadd.xlane.f32.xlu0 %v1309
    %v1391 = vpop.xlane.xlu0 %1390
    %1392 = vadd.xlane.f32.xlu0 %v1310
    %v1393 = vpop.xlane.xlu0 %1392
    %1394 = vadd.xlane.f32.xlu0 %v1311
    %v1395 = vpop.xlane.xlu0 %1394
    %1396 = vadd.xlane.f32.xlu0 %v1312
    %v1397 = vpop.xlane.xlu0 %1396
    %1398 = vadd.xlane.f32.xlu0 %v1313
    %v1399 = vpop.xlane.xlu0 %1398
    %1400 = vadd.xlane.f32.xlu0 %v1314
    %v1401 = vpop.xlane.xlu0 %1400
    %1402 = vadd.xlane.f32.xlu0 %v1315
    %v1403 = vpop.xlane.xlu0 %1402
    %1404 = vadd.xlane.f32.xlu0 %v1316
    %v1405 = vpop.xlane.xlu0 %1404
    %1406 = vadd.xlane.f32.xlu0 %v1317
    %v1407 = vpop.xlane.xlu0 %1406
    %1408 = vadd.xlane.f32.xlu0 %v1318
    %v1409 = vpop.xlane.xlu0 %1408
    %1410 = vadd.xlane.f32.xlu0 %v1319
    %v1411 = vpop.xlane.xlu0 %1410
    %1412 = vadd.xlane.f32.xlu0 %v1320
    %v1413 = vpop.xlane.xlu0 %1412
    %1414 = vadd.xlane.f32.xlu0 %v1321
    %v1415 = vpop.xlane.xlu0 %1414
    %1416 = vadd.xlane.f32.xlu0 %v1322
    %v1417 = vpop.xlane.xlu0 %1416
    %1418 = vadd.xlane.f32.xlu0 %v1323
    %v1419 = vpop.xlane.xlu0 %1418
    %1420 = vadd.xlane.f32.xlu0 %v1324
    %v1421 = vpop.xlane.xlu0 %1420
    %1422 = vadd.xlane.f32.xlu0 %v1325
    %v1423 = vpop.xlane.xlu0 %1422
    %v1424 = vadd.f32 %v1327, %v1329
    %v1425 = vadd.f32 %v1424, %v1331
    %v1426 = vadd.f32 %v1425, %v1333
    %v1427 = vadd.f32 %v1426, %v1335
    %v1428 = vadd.f32 %v1427, %v1337
    %v1429 = vadd.f32 %v1428, %v1339
    %v1430 = vadd.f32 %v1429, %v1341
    %v1431 = vadd.f32 %v1430, %v1343
    %v1432 = vadd.f32 %v1431, %v1345
    %v1433 = vadd.f32 %v1432, %v1347
    %v1434 = vadd.f32 %v1433, %v1349
    %v1435 = vadd.f32 %v1434, %v1351
    %v1436 = vadd.f32 %v1435, %v1353
    %v1437 = vadd.f32 %v1436, %v1355
    %v1438 = vadd.f32 %v1437, %v1357
    %v1439 = vadd.f32 %v1438, %v1359
    %v1440 = vadd.f32 %v1439, %v1361
    %v1441 = vadd.f32 %v1440, %v1363
    %v1442 = vadd.f32 %v1441, %v1365
    %v1443 = vadd.f32 %v1442, %v1367
    %v1444 = vadd.f32 %v1443, %v1369
    %v1445 = vadd.f32 %v1444, %v1371
    %v1446 = vadd.f32 %v1445, %v1373
    %v1447 = vadd.f32 %v1446, %v1375
    %v1448 = vadd.f32 %v1447, %v1377
    %v1449 = vadd.f32 %v1448, %v1379
    %v1450 = vadd.f32 %v1449, %v1381
    %v1451 = vadd.f32 %v1450, %v1383
    %v1452 = vadd.f32 %v1451, %v1385
    %v1453 = vadd.f32 %v1452, %v1387
    %v1454 = vadd.f32 %v1453, %v1389
    %v1455 = vadd.f32 %v1454, %v1391
    %v1456 = vadd.f32 %v1455, %v1393
    %v1457 = vadd.f32 %v1456, %v1395
    %v1458 = vadd.f32 %v1457, %v1397
    %v1459 = vadd.f32 %v1458, %v1399
    %v1460 = vadd.f32 %v1459, %v1401
    %v1461 = vadd.f32 %v1460, %v1403
    %v1462 = vadd.f32 %v1461, %v1405
    %v1463 = vadd.f32 %v1462, %v1407
    %v1464 = vadd.f32 %v1463, %v1409
    %v1465 = vadd.f32 %v1464, %v1411
    %v1466 = vadd.f32 %v1465, %v1413
    %v1467 = vadd.f32 %v1466, %v1415
    %v1468 = vadd.f32 %v1467, %v1417
    %v1469 = vadd.f32 %v1468, %v1419
    %v1470 = vadd.f32 %v1469, %v1421
    %v1471 = vadd.f32 %v1470, %v1423
    %v1472 = vrot.slane %v1471, 4
    %v1473 = vadd.f32 %v1471, %v1472
    %v1474 = vrot.slane %v1473, 2
    %v1475 = vadd.f32 %v1473, %v1474
    %v1476 = vrot.slane %v1475, 1
    %v1477 = vadd.f32 %v1475, %v1476
    %v1478 = vld [vmem:[%s3] sm:$0x1]
    %v1479 = vadd.f32 %v1477, %v1478
    %vm1480 = vcmask 24600
    %1481 = vst.msk [vmem:[#allocation9] sm:$0x1] %vm1480, %v1479
    %s1482 = scalar_lea.vmem [#allocation7], 1568
    %v1483 = vld [vmem:[%s1482] sm:$0xff]
    %v1484 = vld [vmem:[%s1482 + $0x8] sm:$0xff]
    %v1485 = vld [vmem:[%s1482 + $0x10] sm:$0xff]
    %v1486 = vld [vmem:[%s1482 + $0x18] sm:$0xff]
    %v1487 = vld [vmem:[%s1482 + $0x20] sm:$0xff]
    %v1488 = vld [vmem:[%s1482 + $0x28] sm:$0xff]
    %v1489 = vld [vmem:[%s1482 + $0x30] sm:$0xff]
    %v1490 = vld [vmem:[%s1482 + $0x38] sm:$0xff]
    %v1491 = vld [vmem:[%s1482 + $0x40] sm:$0xff]
    %v1492 = vld [vmem:[%s1482 + $0x48] sm:$0xff]
    %v1493 = vld [vmem:[%s1482 + $0x50] sm:$0xff]
    %v1494 = vld [vmem:[%s1482 + $0x58] sm:$0xff]
    %v1495 = vld [vmem:[%s1482 + $0x60] sm:$0xff]
    %v1496 = vld [vmem:[%s1482 + $0x68] sm:$0xff]
    %v1497 = vld [vmem:[%s1482 + $0x70] sm:$0xff]
    %v1498 = vld [vmem:[%s1482 + $0x78] sm:$0xff]
    %v1499 = vld [vmem:[%s1482 + $0x80] sm:$0xff]
    %v1500 = vld [vmem:[%s1482 + $0x88] sm:$0xff]
    %v1501 = vld [vmem:[%s1482 + $0x90] sm:$0xff]
    %v1502 = vld [vmem:[%s1482 + $0x98] sm:$0xff]
    %v1503 = vld [vmem:[%s1482 + $0xa0] sm:$0xff]
    %v1504 = vld [vmem:[%s1482 + $0xa8] sm:$0xff]
    %v1505 = vld [vmem:[%s1482 + $0xb0] sm:$0xff]
    %v1506 = vld [vmem:[%s1482 + $0xb8] sm:$0xff]
    %v1507 = vld [vmem:[%s1482 + $0xc0] sm:$0xff]
    %v1508 = vld [vmem:[%s1482 + $0xc8] sm:$0xff]
    %v1509 = vld [vmem:[%s1482 + $0xd0] sm:$0xff]
    %v1510 = vld [vmem:[%s1482 + $0xd8] sm:$0xff]
    %v1511 = vld [vmem:[%s1482 + $0xe0] sm:$0xff]
    %v1512 = vld [vmem:[%s1482 + $0xe8] sm:$0xff]
    %v1513 = vld [vmem:[%s1482 + $0xf0] sm:$0xff]
    %v1514 = vld [vmem:[%s1482 + $0xf8] sm:$0xff]
    %v1515 = vld [vmem:[%s1482 + $0x100] sm:$0xff]
    %v1516 = vld [vmem:[%s1482 + $0x108] sm:$0xff]
    %v1517 = vld [vmem:[%s1482 + $0x110] sm:$0xff]
    %v1518 = vld [vmem:[%s1482 + $0x118] sm:$0xff]
    %v1519 = vld [vmem:[%s1482 + $0x120] sm:$0xff]
    %v1520 = vld [vmem:[%s1482 + $0x128] sm:$0xff]
    %v1521 = vld [vmem:[%s1482 + $0x130] sm:$0xff]
    %v1522 = vld [vmem:[%s1482 + $0x138] sm:$0xff]
    %v1523 = vld [vmem:[%s1482 + $0x140] sm:$0xff]
    %v1524 = vld [vmem:[%s1482 + $0x148] sm:$0xff]
    %v1525 = vld [vmem:[%s1482 + $0x150] sm:$0xff]
    %v1526 = vld [vmem:[%s1482 + $0x158] sm:$0xff]
    %v1527 = vld [vmem:[%s1482 + $0x160] sm:$0xff]
    %v1528 = vld [vmem:[%s1482 + $0x168] sm:$0xff]
    %v1529 = vld [vmem:[%s1482 + $0x170] sm:$0xff]
    %v1530 = vld [vmem:[%s1482 + $0x178] sm:$0xff]
    %v1531 = vld [vmem:[%s1482 + $0x180] sm:$0xff]
    %v1532 = vmul.f32 %v414, %v1483
    %v1533 = vmul.f32 %v415, %v1484
    %v1534 = vmul.f32 %v416, %v1485
    %v1535 = vmul.f32 %v417, %v1486
    %v1536 = vmul.f32 %v418, %v1487
    %v1537 = vmul.f32 %v419, %v1488
    %v1538 = vmul.f32 %v420, %v1489
    %v1539 = vmul.f32 %v421, %v1490
    %v1540 = vmul.f32 %v422, %v1491
    %v1541 = vmul.f32 %v423, %v1492
    %v1542 = vmul.f32 %v424, %v1493
    %v1543 = vmul.f32 %v425, %v1494
    %v1544 = vmul.f32 %v426, %v1495
    %v1545 = vmul.f32 %v427, %v1496
    %v1546 = vmul.f32 %v428, %v1497
    %v1547 = vmul.f32 %v429, %v1498
    %v1548 = vmul.f32 %v430, %v1499
    %v1549 = vmul.f32 %v431, %v1500
    %v1550 = vmul.f32 %v432, %v1501
    %v1551 = vmul.f32 %v433, %v1502
    %v1552 = vmul.f32 %v434, %v1503
    %v1553 = vmul.f32 %v435, %v1504
    %v1554 = vmul.f32 %v436, %v1505
    %v1555 = vmul.f32 %v437, %v1506
    %v1556 = vmul.f32 %v438, %v1507
    %v1557 = vmul.f32 %v439, %v1508
    %v1558 = vmul.f32 %v440, %v1509
    %v1559 = vmul.f32 %v441, %v1510
    %v1560 = vmul.f32 %v442, %v1511
    %v1561 = vmul.f32 %v443, %v1512
    %v1562 = vmul.f32 %v444, %v1513
    %v1563 = vmul.f32 %v445, %v1514
    %v1564 = vmul.f32 %v446, %v1515
    %v1565 = vmul.f32 %v447, %v1516
    %v1566 = vmul.f32 %v448, %v1517
    %v1567 = vmul.f32 %v449, %v1518
    %v1568 = vmul.f32 %v450, %v1519
    %v1569 = vmul.f32 %v451, %v1520
    %v1570 = vmul.f32 %v452, %v1521
    %v1571 = vmul.f32 %v453, %v1522
    %v1572 = vmul.f32 %v454, %v1523
    %v1573 = vmul.f32 %v455, %v1524
    %v1574 = vmul.f32 %v456, %v1525
    %v1575 = vmul.f32 %v457, %v1526
    %v1576 = vmul.f32 %v458, %v1527
    %v1577 = vmul.f32 %v459, %v1528
    %v1578 = vmul.f32 %v460, %v1529
    %v1579 = vmul.f32 %v461, %v1530
    %v1580 = vmul.f32 %v462, %v1531
    %1581 = vadd.xlane.f32.xlu0 %v1532
    %v1582 = vpop.xlane.xlu0 %1581
    %1583 = vadd.xlane.f32.xlu0 %v1533
    %v1584 = vpop.xlane.xlu0 %1583
    %1585 = vadd.xlane.f32.xlu0 %v1534
    %v1586 = vpop.xlane.xlu0 %1585
    %1587 = vadd.xlane.f32.xlu0 %v1535
    %v1588 = vpop.xlane.xlu0 %1587
    %1589 = vadd.xlane.f32.xlu0 %v1536
    %v1590 = vpop.xlane.xlu0 %1589
    %1591 = vadd.xlane.f32.xlu0 %v1537
    %v1592 = vpop.xlane.xlu0 %1591
    %1593 = vadd.xlane.f32.xlu0 %v1538
    %v1594 = vpop.xlane.xlu0 %1593
    %1595 = vadd.xlane.f32.xlu0 %v1539
    %v1596 = vpop.xlane.xlu0 %1595
    %1597 = vadd.xlane.f32.xlu0 %v1540
    %v1598 = vpop.xlane.xlu0 %1597
    %1599 = vadd.xlane.f32.xlu0 %v1541
    %v1600 = vpop.xlane.xlu0 %1599
    %1601 = vadd.xlane.f32.xlu0 %v1542
    %v1602 = vpop.xlane.xlu0 %1601
    %1603 = vadd.xlane.f32.xlu0 %v1543
    %v1604 = vpop.xlane.xlu0 %1603
    %1605 = vadd.xlane.f32.xlu0 %v1544
    %v1606 = vpop.xlane.xlu0 %1605
    %1607 = vadd.xlane.f32.xlu0 %v1545
    %v1608 = vpop.xlane.xlu0 %1607
    %1609 = vadd.xlane.f32.xlu0 %v1546
    %v1610 = vpop.xlane.xlu0 %1609
    %1611 = vadd.xlane.f32.xlu0 %v1547
    %v1612 = vpop.xlane.xlu0 %1611
    %1613 = vadd.xlane.f32.xlu0 %v1548
    %v1614 = vpop.xlane.xlu0 %1613
    %1615 = vadd.xlane.f32.xlu0 %v1549
    %v1616 = vpop.xlane.xlu0 %1615
    %1617 = vadd.xlane.f32.xlu0 %v1550
    %v1618 = vpop.xlane.xlu0 %1617
    %1619 = vadd.xlane.f32.xlu0 %v1551
    %v1620 = vpop.xlane.xlu0 %1619
    %1621 = vadd.xlane.f32.xlu0 %v1552
    %v1622 = vpop.xlane.xlu0 %1621
    %1623 = vadd.xlane.f32.xlu0 %v1553
    %v1624 = vpop.xlane.xlu0 %1623
    %1625 = vadd.xlane.f32.xlu0 %v1554
    %v1626 = vpop.xlane.xlu0 %1625
    %1627 = vadd.xlane.f32.xlu0 %v1555
    %v1628 = vpop.xlane.xlu0 %1627
    %1629 = vadd.xlane.f32.xlu0 %v1556
    %v1630 = vpop.xlane.xlu0 %1629
    %1631 = vadd.xlane.f32.xlu0 %v1557
    %v1632 = vpop.xlane.xlu0 %1631
    %1633 = vadd.xlane.f32.xlu0 %v1558
    %v1634 = vpop.xlane.xlu0 %1633
    %1635 = vadd.xlane.f32.xlu0 %v1559
    %v1636 = vpop.xlane.xlu0 %1635
    %1637 = vadd.xlane.f32.xlu0 %v1560
    %v1638 = vpop.xlane.xlu0 %1637
    %1639 = vadd.xlane.f32.xlu0 %v1561
    %v1640 = vpop.xlane.xlu0 %1639
    %1641 = vadd.xlane.f32.xlu0 %v1562
    %v1642 = vpop.xlane.xlu0 %1641
    %1643 = vadd.xlane.f32.xlu0 %v1563
    %v1644 = vpop.xlane.xlu0 %1643
    %1645 = vadd.xlane.f32.xlu0 %v1564
    %v1646 = vpop.xlane.xlu0 %1645
    %1647 = vadd.xlane.f32.xlu0 %v1565
    %v1648 = vpop.xlane.xlu0 %1647
    %1649 = vadd.xlane.f32.xlu0 %v1566
    %v1650 = vpop.xlane.xlu0 %1649
    %1651 = vadd.xlane.f32.xlu0 %v1567
    %v1652 = vpop.xlane.xlu0 %1651
    %1653 = vadd.xlane.f32.xlu0 %v1568
    %v1654 = vpop.xlane.xlu0 %1653
    %1655 = vadd.xlane.f32.xlu0 %v1569
    %v1656 = vpop.xlane.xlu0 %1655
    %1657 = vadd.xlane.f32.xlu0 %v1570
    %v1658 = vpop.xlane.xlu0 %1657
    %1659 = vadd.xlane.f32.xlu0 %v1571
    %v1660 = vpop.xlane.xlu0 %1659
    %1661 = vadd.xlane.f32.xlu0 %v1572
    %v1662 = vpop.xlane.xlu0 %1661
    %1663 = vadd.xlane.f32.xlu0 %v1573
    %v1664 = vpop.xlane.xlu0 %1663
    %1665 = vadd.xlane.f32.xlu0 %v1574
    %v1666 = vpop.xlane.xlu0 %1665
    %1667 = vadd.xlane.f32.xlu0 %v1575
    %v1668 = vpop.xlane.xlu0 %1667
    %1669 = vadd.xlane.f32.xlu0 %v1576
    %v1670 = vpop.xlane.xlu0 %1669
    %1671 = vadd.xlane.f32.xlu0 %v1577
    %v1672 = vpop.xlane.xlu0 %1671
    %1673 = vadd.xlane.f32.xlu0 %v1578
    %v1674 = vpop.xlane.xlu0 %1673
    %1675 = vadd.xlane.f32.xlu0 %v1579
    %v1676 = vpop.xlane.xlu0 %1675
    %1677 = vadd.xlane.f32.xlu0 %v1580
    %v1678 = vpop.xlane.xlu0 %1677
    %v1679 = vadd.f32 %v1582, %v1584
    %v1680 = vadd.f32 %v1679, %v1586
    %v1681 = vadd.f32 %v1680, %v1588
    %v1682 = vadd.f32 %v1681, %v1590
    %v1683 = vadd.f32 %v1682, %v1592
    %v1684 = vadd.f32 %v1683, %v1594
    %v1685 = vadd.f32 %v1684, %v1596
    %v1686 = vadd.f32 %v1685, %v1598
    %v1687 = vadd.f32 %v1686, %v1600
    %v1688 = vadd.f32 %v1687, %v1602
    %v1689 = vadd.f32 %v1688, %v1604
    %v1690 = vadd.f32 %v1689, %v1606
    %v1691 = vadd.f32 %v1690, %v1608
    %v1692 = vadd.f32 %v1691, %v1610
    %v1693 = vadd.f32 %v1692, %v1612
    %v1694 = vadd.f32 %v1693, %v1614
    %v1695 = vadd.f32 %v1694, %v1616
    %v1696 = vadd.f32 %v1695, %v1618
    %v1697 = vadd.f32 %v1696, %v1620
    %v1698 = vadd.f32 %v1697, %v1622
    %v1699 = vadd.f32 %v1698, %v1624
    %v1700 = vadd.f32 %v1699, %v1626
    %v1701 = vadd.f32 %v1700, %v1628
    %v1702 = vadd.f32 %v1701, %v1630
    %v1703 = vadd.f32 %v1702, %v1632
    %v1704 = vadd.f32 %v1703, %v1634
    %v1705 = vadd.f32 %v1704, %v1636
    %v1706 = vadd.f32 %v1705, %v1638
    %v1707 = vadd.f32 %v1706, %v1640
    %v1708 = vadd.f32 %v1707, %v1642
    %v1709 = vadd.f32 %v1708, %v1644
    %v1710 = vadd.f32 %v1709, %v1646
    %v1711 = vadd.f32 %v1710, %v1648
    %v1712 = vadd.f32 %v1711, %v1650
    %v1713 = vadd.f32 %v1712, %v1652
    %v1714 = vadd.f32 %v1713, %v1654
    %v1715 = vadd.f32 %v1714, %v1656
    %v1716 = vadd.f32 %v1715, %v1658
    %v1717 = vadd.f32 %v1716, %v1660
    %v1718 = vadd.f32 %v1717, %v1662
    %v1719 = vadd.f32 %v1718, %v1664
    %v1720 = vadd.f32 %v1719, %v1666
    %v1721 = vadd.f32 %v1720, %v1668
    %v1722 = vadd.f32 %v1721, %v1670
    %v1723 = vadd.f32 %v1722, %v1672
    %v1724 = vadd.f32 %v1723, %v1674
    %v1725 = vadd.f32 %v1724, %v1676
    %v1726 = vadd.f32 %v1725, %v1678
    %v1727 = vrot.slane %v1726, 4
    %v1728 = vadd.f32 %v1726, %v1727
    %v1729 = vrot.slane %v1728, 2
    %v1730 = vadd.f32 %v1728, %v1729
    %v1731 = vrot.slane %v1730, 1
    %v1732 = vadd.f32 %v1730, %v1731
    %v1733 = vld [vmem:[%s3] sm:$0x1]
    %v1734 = vadd.f32 %v1732, %v1733
    %vm1735 = vcmask 32800
    %1736 = vst.msk [vmem:[#allocation9] sm:$0x1] %vm1735, %v1734
    // Predicated region
    $region30: #{tpu_custom_call.1} parent=1 // pred_check
      _
    $region31: #{tpu_custom_call.1} parent=1 // pred_check_branch
      %1738 = sbr.rel (0) target = $region33
    $region32: #{tpu_custom_call.1} parent=1 // pred_region
      %1740 = vsyncadd [#allocation4], 0
      %s1742 = sshll.u32 [#allocation9], 4
      %s1743 = int_to_ptr.vmem [resolvable:$true] %s1742
      %s1744 = sshll.u32 %s4, 4
      %s1745 = int_to_ptr.hbm [resolvable:$true] %s1744
      %1747 = dma.vmem_to_hbm [thread:$0]  %s1743, 16, %s1745, [#allocation4]
    $region33: #{tpu_custom_call.1} parent=1 // pred_fallthru
      _
    // Predicated region
    $region34: #{tpu_custom_call.1} parent=1 // pred_check
      _
    $region35: #{tpu_custom_call.1} parent=1 // pred_check_branch
      %1749 = sbr.rel (0) target = $region37
    $region36: #{tpu_custom_call.1} parent=1 // pred_region
      %1751 = dma.done [#allocation4], 16
    $region37: #{tpu_custom_call.1} parent=1 // pred_fallthru
      _
    %1752 = vsyncpa [#allocation3], 1
    %1753 = vsyncpa [#allocation8], 1
    %1754 = vsyncpa [#allocation4], 1
    %1755 = vsyncpa [#allocation5], 1

</llo_original>
